<compile_context>
chip_gen: v5e
topology: v5e:2x2
jax: 0.10.0
libtpu: 0.0.40
codegen_flags: <defaults>
</compile_context>

<pallas_src>
import math

import jax
import jax.numpy as jnp
from jax import lax
from jax.experimental import pallas as pl
from jax.experimental.pallas import tpu as pltpu

_COS_EPS = 1e-8   # torch.nn.CosineSimilarity default eps
_L1_EPS = 1e-12   # module's self.epsilon / F.normalize eps


def _memory_kernel(z_ref, mem_ref, inv_mnorm_ref, zhat_ref, w_ref,
                   dots_acc, zsq_acc, w_bf16):
    """Fused cosine-similarity -> softmax -> hard-shrink -> L1 renorm -> readout."""
    p = pl.program_id(1)   # 0: similarity / weight computation, 1: memory readout
    k = pl.program_id(2)   # D-chunk index (single chunk when the bank is resident)
    kt = pl.num_programs(2)

    # ---------------- phase 0: accumulate <z, mem> and ||z||^2 over D ----------------
    @pl.when(p == 0)
    def _similarity_phase():
        @pl.when(k == 0)
        def _init():
            dots_acc[...] = jnp.zeros_like(dots_acc)
            zsq_acc[...] = jnp.zeros_like(zsq_acc)
            # Defensive init of the (pinned) z_hat block: it is fully overwritten in
            # phase 1 before its only HBM writeback, this just avoids carrying an
            # uninitialized VMEM buffer through phase 0.  Costs no HBM traffic.
            zhat_ref[...] = jnp.zeros_like(zhat_ref)

        zc = z_ref[...]                                           # (TB, TK) f32
        # trans_b contraction: (TB, TK) x (M, TK) -> (TB, M).  No operand transposes
        # in the kernel; the accumulator is lane-dense (M on the lane axis).
        dots_acc[...] += lax.dot_general(
            zc.astype(jnp.bfloat16), mem_ref[...],
            dimension_numbers=(((1,), (1,)), ((), ())),
            preferred_element_type=jnp.float32)
        zsq_acc[...] += jnp.sum(zc * zc, axis=-1, keepdims=True)  # (TB, 1)

        @pl.when(k == kt - 1)
        def _finalize_weights():
            m = w_ref.shape[-1]
            threshold = 1.0 / m

            inv_znorm = lax.rsqrt(jnp.maximum(zsq_acc[...], _COS_EPS * _COS_EPS))
            logits = dots_acc[...] * inv_znorm * inv_mnorm_ref[...]   # cosine sims

            # softmax over the memory dimension (exact divide: tiny (TB, M) tile)
            mx = jnp.max(logits, axis=-1, keepdims=True)
            e = jnp.exp(logits - mx)
            w = e / jnp.sum(e, axis=-1, keepdims=True)

            # hard-shrink reweighting: relu(w - thr) * w / (|w - thr| + eps)
            shifted = w - threshold
            w = jnp.maximum(shifted, 0.0) * w / (jnp.abs(shifted) + _L1_EPS)

            # L1 renormalization along the memory dim (F.normalize p=1, eps=1e-12)
            w = w / jnp.maximum(jnp.sum(jnp.abs(w), axis=-1, keepdims=True), _L1_EPS)

            # mem_weight's block index is constant over (p, k): stays VMEM-resident.
            w_ref[...] = w
            w_bf16[...] = w.astype(jnp.bfloat16)   # cast once for the readout phase

    # ---------------- phase 1: z_hat chunk = mem_weight @ memory chunk ---------------
    @pl.when(p == 1)
    def _readout_phase():
        zhat_ref[...] = jnp.dot(w_bf16[...], mem_ref[...],
                                preferred_element_type=jnp.float32)


def _pick_tile(dim, unit, max_tile):
    """Largest multiple of `unit` that divides `dim` and is <= max_tile (else `dim`)."""
    if dim % unit != 0:
        return dim
    t = min(max_tile, dim)
    t -= t % unit
    while t > 0 and dim % t != 0:
        t -= unit
    return t if t > 0 else dim


def _vmem_capacity_bytes():
    try:
        return int(pltpu.get_tpu_info().vmem_capacity_bytes)
    except Exception:
        return 64 * 1024 * 1024    # conservative fallback (v7x per-core VMEM)


def _vmem_estimate(tb, tk, m):
    """Double-buffered working-set estimate (bytes) for the chosen tiling."""
    bank = 2 * m * tk * 2          # bf16 bank block
    z = 2 * tb * tk * 4            # f32 z block
    zhat = 2 * tb * tk * 4         # f32 z_hat block
    w_out = 2 * tb * m * 4         # f32 mem_weight block
    inv = 2 * m * 4
    scratch = tb * m * 4 + tb * 4 + tb * m * 2
    return bank + z + zhat + w_out + inv + scratch


def _select_tiles(b_pad, d, m, ws_budget):
    """Prefer TK == D (bank VMEM-resident: one HBM pass over the (M, D) bank)."""
    tb = _pick_tile(b_pad, 8, 256)
    while tb > 8 and _vmem_estimate(tb, d, m) > ws_budget:
        tb = _pick_tile(b_pad, 8, tb - 8)
    if _vmem_estimate(tb, d, m) <= ws_budget:
        return tb, d
    # Bank too large to hold on-chip: stream it in (M, TK) chunks.  Keep TB as large
    # as possible so the bank is re-streamed only 2 * (B/TB) times.
    # TODO(synk): for very large banks AND very large B, a b-innermost grid with
    # full (B, M) accumulators would cut bank traffic to exactly two passes.
    tb = _pick_tile(b_pad, 8, 256)
    tk = _pick_tile(d, 128, 1024)
    while tk > 128 and _vmem_estimate(tb, tk, m) > ws_budget:
        nxt = _pick_tile(d, 128, tk - 128)
        if nxt == tk:
            break
        tk = nxt
    return tb, tk


def prepare_memory(memory):
    """One-time preprocessing of the memory parameter (hoisted out of the forward).

    Returns (mem_bf16, inv_mnorm).  Recompute only when the parameter changes; doing
    this per forward call would add ~1.5-2 extra bank-sized HBM passes per call.
    """
    mem_f32 = memory.astype(jnp.float32)
    inv_mnorm = 1.0 / jnp.maximum(
        jnp.sqrt(jnp.sum(mem_f32 * mem_f32, axis=-1)), _COS_EPS)
    return memory.astype(jnp.bfloat16), inv_mnorm.reshape(1, -1).astype(jnp.float32)


def encoder_and_memory_forward(x, mem_bf16, inv_mnorm, *, batch_tile=None, d_tile=None):
    """x: (B, C, H, W); mem_bf16: (M, D) with D == C*H*W; inv_mnorm: (1, M).

    Returns dict(z_hat=(B, C, H, W) f32, mem_weight=(B, M) f32).
    """
    B, C, H, W = x.shape
    M, D = mem_bf16.shape
    assert D == C * H * W, "feature_dims must equal C*H*W"

    # Encoder stand-in (identity flatten); see TODO at the top of the file.
    z = x.reshape(B, D).astype(jnp.float32)

    # Pad the batch to a sublane multiple.  Zero rows are safe: zero dots + clamped
    # norms -> uniform softmax -> hard-shrink kills everything -> zero weights.
    b_pad = ((B + 7) // 8) * 8
    if b_pad != B:
        z = jnp.pad(z, ((0, b_pad - B), (0, 0)))

    ws_budget = min(28 << 20, _vmem_capacity_bytes() * 3 // 8)
    tb_auto, tk_auto = _select_tiles(b_pad, D, M, ws_budget)
    TB = batch_tile if batch_tile is not None else tb_auto
    TK = d_tile if d_tile is not None else tk_auto
    assert b_pad % TB == 0 and D % TK == 0
    kt = D // TK
    grid = (b_pad // TB, 2, kt)

    compiler_kwargs = dict(dimension_semantics=("parallel", "arbitrary", "arbitrary"))
    est = _vmem_estimate(TB, TK, M)
    if est > (12 << 20):
        # Raise the scoped-VMEM limit explicitly (v5e's default is only ~16 MiB) but
        # stay well inside physical VMEM (64 MiB on v7x).
        compiler_kwargs["vmem_limit_bytes"] = int(
            min(est * 3 // 2, _vmem_capacity_bytes() * 3 // 4))

    z_hat, mem_weight = pl.pallas_call(
        _memory_kernel,
        out_shape=(
            jax.ShapeDtypeStruct((b_pad, D), jnp.float32),
            jax.ShapeDtypeStruct((b_pad, M), jnp.float32),
        ),
        grid=grid,
        in_specs=[
            # z is only read in phase 0; during phase 1 pin its block to the LAST
            # chunk so the phase transition does not trigger a wasted re-fetch.
            pl.BlockSpec((TB, TK),
                         lambda b, p, k, last=kt - 1: (b, k * (1 - p) + last * p)),
            # Memory bank.  With TK == D (default whenever it fits the VMEM budget)
            # the block index is constant for the whole grid, so the bank is DMA'd
            # from HBM exactly once and stays resident; otherwise it is streamed in
            # (M, TK) chunks, double-buffered by the BlockSpec pipeline.
            pl.BlockSpec((M, TK), lambda b, p, k: (0, k)),
            # Precomputed inverse row norms: fetched once.
            pl.BlockSpec((1, M), lambda b, p, k: (0, 0)),
        ],
        out_specs=(
            # z_hat is written in phase 1; its block index is pinned during phase 0 so
            # each (TB, TK) tile is written back to HBM exactly once.
            pl.BlockSpec((TB, TK), lambda b, p, k: (b, k * p)),
            # mem_weight block index is constant over (p, k): resident accumulator,
            # written in phase 0, consumed (via the bf16 scratch) in phase 1.
            pl.BlockSpec((TB, M), lambda b, p, k: (b, 0)),
        ),
        scratch_shapes=[
            pltpu.VMEM((TB, M), jnp.float32),    # lane-dense dots accumulator
            pltpu.VMEM((TB, 1), jnp.float32),    # ||z||^2 accumulator
            pltpu.VMEM((TB, M), jnp.bfloat16),   # mem_weight cast once for readout
        ],
        compiler_params=pltpu.CompilerParams(**compiler_kwargs),
    )(z, mem_bf16, inv_mnorm)

    if b_pad != B:
        z_hat = z_hat[:B]
        mem_weight = mem_weight[:B]
    return dict(z_hat=z_hat.reshape(B, C, H, W), mem_weight=mem_weight)


def init_memory(key, mem_dim, feature_dims):
    # nn.init.kaiming_uniform_ on a (MEM_DIM, feature_dims) tensor:
    # fan_in = feature_dims, gain = sqrt(2), bound = sqrt(6 / fan_in)
    bound = math.sqrt(6.0 / feature_dims)
    return jax.random.uniform(
        key, (mem_dim, feature_dims), dtype=jnp.float32, minval=-bound, maxval=bound
    )


def _reference_forward(x, mem_bf16, inv_mnorm):
    """Pure-JAX reference mirroring the kernel's numerics (bf16 matmuls, f32 math)."""
    B = x.shape[0]
    M, D = mem_bf16.shape
    z = x.reshape(B, D).astype(jnp.float32)
    dots = jnp.dot(z.astype(jnp.bfloat16), mem_bf16.T,
                   preferred_element_type=jnp.float32)
    inv_zn = lax.rsqrt(jnp.maximum(jnp.sum(z * z, axis=-1, keepdims=True),
                                   _COS_EPS * _COS_EPS))
    logits = dots * inv_zn * inv_mnorm
    w = jax.nn.softmax(logits, axis=-1)
    thr = 1.0 / M
    w = jnp.maximum(w - thr, 0.0) * w / (jnp.abs(w - thr) + _L1_EPS)
    w = w / jnp.maximum(jnp.sum(jnp.abs(w), axis=-1, keepdims=True), _L1_EPS)
    z_hat = jnp.dot(w.astype(jnp.bfloat16), mem_bf16,
                    preferred_element_type=jnp.float32)
    return z_hat.reshape(x.shape), w


if __name__ == "__main__":
    # Small shapes consistent with the module's assert (feature_dims == C*H*W).
    B, C, H, W = 16, 4, 16, 16
    D = C * H * W            # 1024
    MEM_DIM = 256

    key = jax.random.PRNGKey(0)
    kx, km = jax.random.split(key)
    x = jax.random.normal(kx, (B, C, H, W), dtype=jnp.float32)
    memory = init_memory(km, MEM_DIM, D)

    # One-time parameter preprocessing, hoisted out of the per-call forward.
    mem_bf16, inv_mnorm = prepare_memory(memory)

    fwd = jax.jit(encoder_and_memory_forward, static_argnames=("batch_tile", "d_tile"))

    # Default tiling: single full-B batch tile, TK == D -> the memory bank is fetched
    # from HBM once and held VMEM-resident for the whole kernel.
    out = fwd(x, mem_bf16, inv_mnorm)
    # Small explicit tiles: exercises multi-batch-tile + multi-D-chunk accumulation
    # (the streamed-bank path) through the same kernel body.
    out_small = fwd(x, mem_bf16, inv_mnorm, batch_tile=8, d_tile=256)

    z_hat = jax.block_until_ready(out["z_hat"])
    mem_weight = jax.block_until_ready(out["mem_weight"])
    z_hat_s = jax.block_until_ready(out_small["z_hat"])
    mem_weight_s = jax.block_until_ready(out_small["mem_weight"])

    z_hat_ref, mem_weight_ref = _reference_forward(x, mem_bf16, inv_mnorm)

    assert z_hat.shape == (B, C, H, W) and mem_weight.shape == (B, MEM_DIM)
    assert bool(jnp.all(jnp.isfinite(z_hat))) and bool(jnp.all(jnp.isfinite(mem_weight)))

    # Exact divides in the kernel -> each mem_weight row sums to 1 up to f32 rounding.
    row_sums = jnp.sum(mem_weight, axis=-1)
    assert bool(jnp.all(jnp.abs(row_sums - 1.0) < 1e-3)), row_sums

    for zh, mw in ((z_hat, mem_weight), (z_hat_s, mem_weight_s)):
        # Tolerances cover accumulation-order differences (and the hard-shrink
        # discontinuity at the 1/M threshold) vs. the one-shot XLA reference.
        assert float(jnp.max(jnp.abs(zh - z_hat_ref))) < 2e-3
        assert float(jnp.max(jnp.abs(mw - mem_weight_ref))) < 2e-2

    print("KERNEL_OK")
</pallas_src>

<mosaic_0001>
module attributes {stable_mosaic.version = 11 : i64} {
  func.func @_memory_kernel(%arg0: i32, %arg1: i32, %arg2: i32, %arg3: memref<16x1024xf32, #tpu.memory_space<vmem>>, %arg4: memref<256x1024xbf16, #tpu.memory_space<vmem>>, %arg5: memref<1x256xf32, #tpu.memory_space<vmem>>, %arg6: memref<16x1024xf32, #tpu.memory_space<vmem>>, %arg7: memref<16x256xf32, #tpu.memory_space<vmem>>, %arg8: memref<16x256xf32, #tpu.memory_space<vmem>>, %arg9: memref<16x1xf32, #tpu.memory_space<vmem>>, %arg10: memref<16x256xbf16, #tpu.memory_space<vmem>>) attributes {dimension_semantics = [#tpu.dimension_semantics<parallel>, #tpu.dimension_semantics<arbitrary>, #tpu.dimension_semantics<arbitrary>], iteration_bounds = array<i64: 1, 2, 1>, scalar_prefetch = 0 : i64, scratch_operands = 3 : i64, tpu.core_type = #tpu.core_type<tc>, window_params = [{transform_indices = @transform_0, window_bounds = array<i64: 16, 1024>}, {transform_indices = @transform_1, window_bounds = array<i64: 256, 1024>}, {pipeline_mode = #tpu.pipeline_mode<synchronous>, transform_indices = @transform_2, window_bounds = array<i64: 1, 256>}, {transform_indices = @transform_3, window_bounds = array<i64: 16, 1024>}, {transform_indices = @transform_4, window_bounds = array<i64: 16, 256>}]} {
    %c0_i32 = arith.constant 0 : i32
    %0 = arith.cmpi eq, %arg1, %c0_i32 : i32
    %1 = arith.extui %0 : i1 to i32
    %c0_i32_0 = arith.constant 0 : i32
    %2 = arith.cmpi ne, %1, %c0_i32_0 : i32
    scf.if %2 {
      %c0_i32_2 = arith.constant 0 : i32
      %6 = arith.cmpi eq, %arg2, %c0_i32_2 : i32
      %7 = arith.extui %6 : i1 to i32
      %c0_i32_3 = arith.constant 0 : i32
      %8 = arith.cmpi ne, %7, %c0_i32_3 : i32
      scf.if %8 {
        %cst_18 = arith.constant 0.000000e+00 : f32
        %25 = vector.broadcast %cst_18 : f32 to vector<16x256xf32>
        %c0_19 = arith.constant 0 : index
        %c0_20 = arith.constant 0 : index
        %26 = vector.load %arg8[%c0_19, %c0_20] : memref<16x256xf32, #tpu.memory_space<vmem>>, vector<16x256xf32>
        tpu.vector_store %arg8[%c0_19, %c0_20], %25 {strides = array<i32>} : memref<16x256xf32, #tpu.memory_space<vmem>>, vector<16x256xf32>,
        %cst_21 = arith.constant 0.000000e+00 : f32
        %27 = vector.broadcast %cst_21 : f32 to vector<16x1xf32>
        %c0_22 = arith.constant 0 : index
        %c0_23 = arith.constant 0 : index
        %28 = vector.load %arg9[%c0_22, %c0_23] : memref<16x1xf32, #tpu.memory_space<vmem>>, vector<16x1xf32>
        tpu.vector_store %arg9[%c0_22, %c0_23], %27 {strides = array<i32>} : memref<16x1xf32, #tpu.memory_space<vmem>>, vector<16x1xf32>,
        %cst_24 = arith.constant 0.000000e+00 : f32
        %29 = vector.broadcast %cst_24 : f32 to vector<16x1024xf32>
        %c0_25 = arith.constant 0 : index
        %c0_26 = arith.constant 0 : index
        %30 = vector.load %arg6[%c0_25, %c0_26] : memref<16x1024xf32, #tpu.memory_space<vmem>>, vector<16x1024xf32>
        tpu.vector_store %arg6[%c0_25, %c0_26], %29 {strides = array<i32>} : memref<16x1024xf32, #tpu.memory_space<vmem>>, vector<16x1024xf32>,
      } else {
      }
      %c0 = arith.constant 0 : index
      %c0_4 = arith.constant 0 : index
      %9 = vector.load %arg3[%c0, %c0_4] : memref<16x1024xf32, #tpu.memory_space<vmem>>, vector<16x1024xf32>
      %c0_5 = arith.constant 0 : index
      %c0_6 = arith.constant 0 : index
      %10 = vector.load %arg8[%c0_5, %c0_6] : memref<16x256xf32, #tpu.memory_space<vmem>>, vector<16x256xf32>
      %11 = arith.truncf %9 : vector<16x1024xf32> to vector<16x1024xbf16>
      %c0_7 = arith.constant 0 : index
      %c0_8 = arith.constant 0 : index
      %12 = vector.load %arg4[%c0_7, %c0_8] : memref<256x1024xbf16, #tpu.memory_space<vmem>>, vector<256x1024xbf16>
      %cst = arith.constant dense<0.000000e+00> : vector<16x256xf32>
      %13 = tpu.matmul %11, %12, %cst {dimension_numbers = #tpu.dot_dimension_numbers<[1], [1], [0], [0], [0, 0, 1, 0], [], []>} : vector<16x1024xbf16>, vector<256x1024xbf16>, vector<16x256xf32> -> vector<16x256xf32>
      %14 = arith.addf %10, %13 : vector<16x256xf32>
      %c0_9 = arith.constant 0 : index
      %c0_10 = arith.constant 0 : index
      %15 = vector.load %arg8[%c0_9, %c0_10] : memref<16x256xf32, #tpu.memory_space<vmem>>, vector<16x256xf32>
      tpu.vector_store %arg8[%c0_9, %c0_10], %14 {strides = array<i32>} : memref<16x256xf32, #tpu.memory_space<vmem>>, vector<16x256xf32>,
      %c0_11 = arith.constant 0 : index
      %c0_12 = arith.constant 0 : index
      %16 = vector.load %arg9[%c0_11, %c0_12] : memref<16x1xf32, #tpu.memory_space<vmem>>, vector<16x1xf32>
      %17 = arith.mulf %9, %9 : vector<16x1024xf32>
      %cst_13 = arith.constant dense<0.000000e+00> : vector<16xf32>
      %18 = vector.multi_reduction <add>, %17, %cst_13 [1] : vector<16x1024xf32> to vector<16xf32>
      %19 = vector.shape_cast %18 : vector<16xf32> to vector<16x1xf32>
      %20 = arith.addf %16, %19 : vector<16x1xf32>
      %c0_14 = arith.constant 0 : index
      %c0_15 = arith.constant 0 : index
      %21 = vector.load %arg9[%c0_14, %c0_15] : memref<16x1xf32, #tpu.memory_space<vmem>>, vector<16x1xf32>
      tpu.vector_store %arg9[%c0_14, %c0_15], %20 {strides = array<i32>} : memref<16x1xf32, #tpu.memory_space<vmem>>, vector<16x1xf32>,
      %c0_i32_16 = arith.constant 0 : i32
      %22 = arith.cmpi eq, %arg2, %c0_i32_16 : i32
      %23 = arith.extui %22 : i1 to i32
      %c0_i32_17 = arith.constant 0 : i32
      %24 = arith.cmpi ne, %23, %c0_i32_17 : i32
      scf.if %24 {
        %c0_18 = arith.constant 0 : index
        %c0_19 = arith.constant 0 : index
        %25 = vector.load %arg9[%c0_18, %c0_19] : memref<16x1xf32, #tpu.memory_space<vmem>>, vector<16x1xf32>
        %cst_20 = arith.constant 1.000000e-16 : f32
        %26 = vector.broadcast %cst_20 : f32 to vector<16x1xf32>
        %27 = arith.maximumf %25, %26 : vector<16x1xf32>
        %28 = math.rsqrt %27 : vector<16x1xf32>
        %c0_21 = arith.constant 0 : index
        %c0_22 = arith.constant 0 : index
        %29 = vector.load %arg8[%c0_21, %c0_22] : memref<16x256xf32, #tpu.memory_space<vmem>>, vector<16x256xf32>
        %30 = vector.broadcast %28 : vector<16x1xf32> to vector<16x256xf32>
        %31 = arith.mulf %29, %30 : vector<16x256xf32>
        %c0_23 = arith.constant 0 : index
        %c0_24 = arith.constant 0 : index
        %32 = vector.load %arg5[%c0_23, %c0_24] : memref<1x256xf32, #tpu.memory_space<vmem>>, vector<1x256xf32>
        %33 = vector.broadcast %32 : vector<1x256xf32> to vector<16x256xf32>
        %34 = arith.mulf %31, %33 : vector<16x256xf32>
        %cst_25 = arith.constant dense<0xFF800000> : vector<16xf32>
        %35 = vector.multi_reduction <maximumf>, %34, %cst_25 [1] : vector<16x256xf32> to vector<16xf32>
        %36 = vector.shape_cast %35 : vector<16xf32> to vector<16x1xf32>
        %37 = vector.broadcast %36 : vector<16x1xf32> to vector<16x256xf32>
        %38 = arith.subf %34, %37 : vector<16x256xf32>
        %39 = math.exp %38 : vector<16x256xf32>
        %cst_26 = arith.constant dense<0.000000e+00> : vector<16xf32>
        %40 = vector.multi_reduction <add>, %39, %cst_26 [1] : vector<16x256xf32> to vector<16xf32>
        %41 = vector.shape_cast %40 : vector<16xf32> to vector<16x1xf32>
        %42 = vector.broadcast %41 : vector<16x1xf32> to vector<16x256xf32>
        %43 = arith.divf %39, %42 : vector<16x256xf32>
        %cst_27 = arith.constant 3.906250e-03 : f32
        %44 = vector.broadcast %cst_27 : f32 to vector<16x256xf32>
        %45 = arith.subf %43, %44 : vector<16x256xf32>
        %cst_28 = arith.constant 0.000000e+00 : f32
        %46 = vector.broadcast %cst_28 : f32 to vector<16x256xf32>
        %47 = arith.maximumf %45, %46 : vector<16x256xf32>
        %48 = arith.mulf %47, %43 : vector<16x256xf32>
        %49 = math.absf %45 : vector<16x256xf32>
        %cst_29 = arith.constant 9.99999996E-13 : f32
        %50 = vector.broadcast %cst_29 : f32 to vector<16x256xf32>
        %51 = arith.addf %49, %50 : vector<16x256xf32>
        %52 = arith.divf %48, %51 : vector<16x256xf32>
        %53 = math.absf %52 : vector<16x256xf32>
        %cst_30 = arith.constant dense<0.000000e+00> : vector<16xf32>
        %54 = vector.multi_reduction <add>, %53, %cst_30 [1] : vector<16x256xf32> to vector<16xf32>
        %55 = vector.shape_cast %54 : vector<16xf32> to vector<16x1xf32>
        %cst_31 = arith.constant 9.99999996E-13 : f32
        %56 = vector.broadcast %cst_31 : f32 to vector<16x1xf32>
        %57 = arith.maximumf %55, %56 : vector<16x1xf32>
        %58 = vector.broadcast %57 : vector<16x1xf32> to vector<16x256xf32>
        %59 = arith.divf %52, %58 : vector<16x256xf32>
        %c0_32 = arith.constant 0 : index
        %c0_33 = arith.constant 0 : index
        %60 = vector.load %arg7[%c0_32, %c0_33] : memref<16x256xf32, #tpu.memory_space<vmem>>, vector<16x256xf32>
        tpu.vector_store %arg7[%c0_32, %c0_33], %59 {strides = array<i32>} : memref<16x256xf32, #tpu.memory_space<vmem>>, vector<16x256xf32>,
        %61 = arith.truncf %59 : vector<16x256xf32> to vector<16x256xbf16>
        %c0_34 = arith.constant 0 : index
        %c0_35 = arith.constant 0 : index
        %62 = vector.load %arg10[%c0_34, %c0_35] : memref<16x256xbf16, #tpu.memory_space<vmem>>, vector<16x256xbf16>
        tpu.vector_store %arg10[%c0_34, %c0_35], %61 {strides = array<i32>} : memref<16x256xbf16, #tpu.memory_space<vmem>>, vector<16x256xbf16>,
      } else {
      }
    } else {
    }
    %c1_i32 = arith.constant 1 : i32
    %3 = arith.cmpi eq, %arg1, %c1_i32 : i32
    %4 = arith.extui %3 : i1 to i32
    %c0_i32_1 = arith.constant 0 : i32
    %5 = arith.cmpi ne, %4, %c0_i32_1 : i32
    scf.if %5 {
      %c0 = arith.constant 0 : index
      %c0_2 = arith.constant 0 : index
      %6 = vector.load %arg10[%c0, %c0_2] : memref<16x256xbf16, #tpu.memory_space<vmem>>, vector<16x256xbf16>
      %c0_3 = arith.constant 0 : index
      %c0_4 = arith.constant 0 : index
      %7 = vector.load %arg4[%c0_3, %c0_4] : memref<256x1024xbf16, #tpu.memory_space<vmem>>, vector<256x1024xbf16>
      %cst = arith.constant dense<0.000000e+00> : vector<16x1024xf32>
      %8 = tpu.matmul %6, %7, %cst {dimension_numbers = #tpu.dot_dimension_numbers<[1], [0], [0], [1], [0, 0, 1, 1], [], []>} : vector<16x256xbf16>, vector<256x1024xbf16>, vector<16x1024xf32> -> vector<16x1024xf32>
      %c0_5 = arith.constant 0 : index
      %c0_6 = arith.constant 0 : index
      %9 = vector.load %arg6[%c0_5, %c0_6] : memref<16x1024xf32, #tpu.memory_space<vmem>>, vector<16x1024xf32>
      tpu.vector_store %arg6[%c0_5, %c0_6], %8 {strides = array<i32>} : memref<16x1024xf32, #tpu.memory_space<vmem>>, vector<16x1024xf32>,
    } else {
    }
    return
  }
  func.func @transform_0(%arg0: i32, %arg1: i32, %arg2: i32) -> (i32, i32) {
    %c1_i32 = arith.constant 1 : i32
    %0 = arith.subi %c1_i32, %arg1 : i32
    %1 = arith.muli %arg2, %0 : i32
    %c0_i32 = arith.constant 0 : i32
    %2 = arith.muli %c0_i32, %arg1 : i32
    %3 = arith.addi %1, %2 : i32
    %c0_i32_0 = arith.constant 0 : i32
    return %arg0, %3 : i32, i32
  }
  func.func @transform_1(%arg0: i32, %arg1: i32, %arg2: i32) -> (i32, i32) {
    %c0_i32 = arith.constant 0 : i32
    %c0_i32_0 = arith.constant 0 : i32
    return %c0_i32, %arg2 : i32, i32
  }
  func.func @transform_2(%arg0: i32, %arg1: i32, %arg2: i32) -> (i32, i32) {
    %c0_i32 = arith.constant 0 : i32
    %c0_i32_0 = arith.constant 0 : i32
    %c0_i32_1 = arith.constant 0 : i32
    return %c0_i32, %c0_i32_0 : i32, i32
  }
  func.func @transform_3(%arg0: i32, %arg1: i32, %arg2: i32) -> (i32, i32) {
    %0 = arith.muli %arg2, %arg1 : i32
    %c0_i32 = arith.constant 0 : i32
    return %arg0, %0 : i32, i32
  }
  func.func @transform_4(%arg0: i32, %arg1: i32, %arg2: i32) -> (i32, i32) {
    %c0_i32 = arith.constant 0 : i32
    %c0_i32_0 = arith.constant 0 : i32
    return %arg0, %c0_i32 : i32, i32
  }
}

</mosaic_0001>

<llo_original>
// kernel: encoder_and_memory_forward.1
$region0: #{encoder_and_memory_forward.1}
  #allocation0 [shape = 'u32[]', space=smem, size = 0x4, offset = 0x4, fixed_abs, tag = 'smem constant byte address 0x4 - core index']
  #allocation1 [shape = 'u32[72,128]{1,0:T(1,128)}', space=vmem, size = 0x9000, scoped, tag = 'internal scratch']
  #allocation2 [shape = 'f32[16,256]{1,0:T(8,128)}', space=vmem, size = 0x4000, scoped, tag = 'scratch operand']
  #allocation3 [shape = 'f32[16,1]{1,0:T(8,128)}', space=vmem, size = 0x2000, scoped, tag = 'scratch operand']
  #allocation4 [shape = 'bf16[16,256]{1,0:T(8,128)(2,1)}', space=vmem, size = 0x2000, scoped, tag = 'scratch operand']
  %s0 = inlined_call_operand.vmem [shape: f32[16,1024], index: 0, kind: input, shape index: {}]
  %s1 = inlined_call_operand.vmem [shape: bf16[256,1024], index: 1, kind: input, shape index: {}]
  %s2 = inlined_call_operand.vmem [shape: f32[1,256], index: 2, kind: input, shape index: {}]
  %s3 = inlined_call_operand.vmem [shape: f32[16,1024], index: 3, kind: output, shape index: {0}]
  %s4 = inlined_call_operand.hbm [shape: f32[16,256], index: 4, kind: output, shape index: {1}]
  %5 = xla_tuple %s3, %s4
  %s6 = sld [smem:[#allocation0]]
  $region69: #{encoder_and_memory_forward.1} parent=0
    _
  %s8 = ssub.s32 1, %s6
  %s9 = scalar_select 0, %s8, %s6
  $region1: #{encoder_and_memory_forward.1} parent=0
    #allocation5 [shape = 'u8[16384]{0}', space=vmem, size = 0x4000, scoped, tag = 'output window, operand 1, single buffered']
    #allocation6 [shape = 's32[2]{0}', space=sflag, size = 0x8, scoped, tag = 'scoped memory for encoder_and_memory_forward.1']
    %10 = vsyncpa [#allocation6], 0
    loop: start=0, step=1, limit=4
    $region2: #{encoder_and_memory_forward.1} parent=1 // loop_pre_header
      _
    $region3: #{encoder_and_memory_forward.1} parent=1 // loop_header
      %s12 = sphi 0, %s16
      %p13 = scmp.ge.s32.totalorder %s12, 4
      %s19 = sphi 0, %s38
      %s20 = sphi 0, %s34
      %s21 = sphi 0, %s30
      %s22 = sphi 0, %s19
      %s23 = sphi 0, %s20
      %s24 = sphi 0, %s21
      %s25 = sphi 0, %s22
      %s26 = sphi 0, %s23
      %s27 = sphi 0, %s24
      %s47 = sphi 0, %s49
      %s50 = sphi 0, %s47
      %s51 = sphi 0, %s50
      %s67 = sphi 0, %s51
      %s73 = sphi 0, %s75
      %s76 = sphi 0, %s73
      %s77 = sphi 0, %s76
      %s93 = sphi 0, %s77
      %s97 = sphi 0, %s97
      %s99 = sphi 0, %s97
      %s100 = sphi 0, %s99
      %s114 = sphi 0, %s100
      %s124 = sphi 0, %s126
      %s127 = sphi 0, %s124
      %s128 = sphi 0, %s127
      %s144 = sphi 0, %s128
      %s150 = sphi 0, %s152
      %s153 = sphi 0, %s150
      %s154 = sphi 0, %s153
      %s170 = sphi 0, %s154
    $region4: #{encoder_and_memory_forward.1} parent=1 // loop_header_branch
      %15 = sbr.rel (%p13) target = $region8
    $region5: #{encoder_and_memory_forward.1} parent=1 // loop_body
      %s17 = ssub.s32 %s12, 1
      %s18 = ssub.s32 %s12, 2
      %s28 = sadd.s32 1, %s21
      %p29 = scmp.ge.s32.totalorder %s28, 1
      %s30 = scalar_select %p29, 0, %s28
      %s31 = sadd.s32 1, %s20
      %s32 = scalar_select %p29, %s31, %s20
      %p33 = scmp.ge.s32.totalorder %s32, 2
      %s34 = scalar_select %p33, 0, %s32
      %s35 = sadd.s32 1, %s19
      %s36 = scalar_select %p33, %s35, %s19
      %p37 = scmp.ge.s32.totalorder %s36, 1
      %s38 = scalar_select %p37, 0, %s36
      %s39 = ssub.s32 1, %s20
      %s40 = smul.u32 %s21, %s39
      %s41 = ssub.s32 1, %s34
      %s42 = smul.u32 %s30, %s41
      %s43 = ssub.s32 %s19, %s38
      %s44 = ssub.s32 %s40, %s42
      %s45 = sor.u32 %s43, %s44
      %p46 = scmp.eq.s32.totalorder %s45, 0
      %s48 = sadd.s32 %s47, 1
      %s49 = scalar_select %p46, %s47, %s48
      %p52 = pneg %p46
      %p53 = scmp.eq.s32.totalorder %s12, 1
      %p54 = por %p52, %p53
      %p55 = scmp.ne.s32.totalorder %s47, %s50
      %p56 = scmp.eq.s32.totalorder %s12, 0
      %p57 = por %p55, %p56
      %p58 = scmp.ne.s32.totalorder %s47, %s50
      %p59 = scmp.eq.s32.totalorder %s17, 1
      %p60 = por %p58, %p59
      %p61 = scmp.ne.s32.totalorder %s50, %s51
      %p62 = scmp.eq.s32.totalorder %s17, 0
      %p63 = por %p61, %p62
      %p64 = scmp.ne.s32.totalorder %s50, %s51
      %p65 = scmp.eq.s32.totalorder %s18, 1
      %p66 = por %p64, %p65
      %p68 = scmp.ne.s32.totalorder %s51, %s67
      %p69 = scmp.eq.s32.totalorder %s18, 0
      %p70 = por %p68, %p69
      %s71 = ssub.s32 %s21, %s30
      %p72 = scmp.eq.s32.totalorder %s71, 0
      %s74 = sadd.s32 %s73, 1
      %s75 = scalar_select %p72, %s73, %s74
      %p78 = pneg %p72
      %p79 = scmp.eq.s32.totalorder %s12, 1
      %p80 = por %p78, %p79
      %p81 = scmp.ne.s32.totalorder %s73, %s76
      %p82 = scmp.eq.s32.totalorder %s12, 0
      %p83 = por %p81, %p82
      %p84 = scmp.ne.s32.totalorder %s73, %s76
      %p85 = scmp.eq.s32.totalorder %s17, 1
      %p86 = por %p84, %p85
      %p87 = scmp.ne.s32.totalorder %s76, %s77
      %p88 = scmp.eq.s32.totalorder %s17, 0
      %p89 = por %p87, %p88
      %p90 = scmp.ne.s32.totalorder %s76, %s77
      %p91 = scmp.eq.s32.totalorder %s18, 1
      %p92 = por %p90, %p91
      %p94 = scmp.ne.s32.totalorder %s77, %s93
      %p95 = scmp.eq.s32.totalorder %s18, 0
      %p96 = por %p94, %p95
      %s98 = sadd.s32 %s97, 1
      %p101 = scmp.eq.s32.totalorder %s12, 1
      %p102 = scmp.ne.s32.totalorder %s97, %s99
      %p103 = scmp.eq.s32.totalorder %s12, 0
      %p104 = por %p102, %p103
      %p105 = scmp.ne.s32.totalorder %s97, %s99
      %p106 = scmp.eq.s32.totalorder %s17, 1
      %p107 = por %p105, %p106
      %p108 = scmp.ne.s32.totalorder %s99, %s100
      %p109 = scmp.eq.s32.totalorder %s17, 0
      %p110 = por %p108, %p109
      %p111 = scmp.ne.s32.totalorder %s99, %s100
      %p112 = scmp.eq.s32.totalorder %s18, 1
      %p113 = por %p111, %p112
      %p115 = scmp.ne.s32.totalorder %s100, %s114
      %p116 = scmp.eq.s32.totalorder %s18, 0
      %p117 = por %p115, %p116
      %s118 = smul.u32 %s21, %s20
      %s119 = smul.u32 %s30, %s34
      %s120 = ssub.s32 %s19, %s38
      %s121 = ssub.s32 %s118, %s119
      %s122 = sor.u32 %s120, %s121
      %p123 = scmp.eq.s32.totalorder %s122, 0
      %s125 = sadd.s32 %s124, 1
      %s126 = scalar_select %p123, %s124, %s125
      %p129 = pneg %p123
      %p130 = scmp.eq.s32.totalorder %s12, 1
      %p131 = por %p129, %p130
      %p132 = scmp.ne.s32.totalorder %s124, %s127
      %p133 = scmp.eq.s32.totalorder %s12, 0
      %p134 = por %p132, %p133
      %p135 = scmp.ne.s32.totalorder %s124, %s127
      %p136 = scmp.eq.s32.totalorder %s17, 1
      %p137 = por %p135, %p136
      %p138 = scmp.ne.s32.totalorder %s127, %s128
      %p139 = scmp.eq.s32.totalorder %s17, 0
      %p140 = por %p138, %p139
      %p141 = scmp.ne.s32.totalorder %s127, %s128
      %p142 = scmp.eq.s32.totalorder %s18, 1
      %p143 = por %p141, %p142
      %p145 = scmp.ne.s32.totalorder %s128, %s144
      %p146 = scmp.eq.s32.totalorder %s18, 0
      %p147 = por %p145, %p146
      %s148 = ssub.s32 %s19, %s38
      %p149 = scmp.eq.s32.totalorder %s148, 0
      %s151 = sadd.s32 %s150, 1
      %s152 = scalar_select %p149, %s150, %s151
      %p155 = pneg %p149
      %p156 = scmp.eq.s32.totalorder %s12, 1
      %p157 = por %p155, %p156
      %p158 = scmp.ne.s32.totalorder %s150, %s153
      %p159 = scmp.eq.s32.totalorder %s12, 0
      %p160 = por %p158, %p159
      %p161 = scmp.ne.s32.totalorder %s150, %s153
      %p162 = scmp.eq.s32.totalorder %s17, 1
      %p163 = por %p161, %p162
      %p164 = scmp.ne.s32.totalorder %s153, %s154
      %p165 = scmp.eq.s32.totalorder %s17, 0
      %p166 = por %p164, %p165
      %p167 = scmp.ne.s32.totalorder %s153, %s154
      %p168 = scmp.eq.s32.totalorder %s18, 1
      %p169 = por %p167, %p168
      %p171 = scmp.ne.s32.totalorder %s154, %s170
      %p172 = scmp.eq.s32.totalorder %s18, 0
      %p173 = por %p171, %p172
      %p174 = scmp.le.s32.totalorder 1, %s12
      %p175 = scmp.lt.s32.totalorder %s12, 3
      %p176 = pnand %p174, %p175
      %p177 = pneg %p176
      // Predicated region
      $region9: #{encoder_and_memory_forward.1} parent=5 // pred_check
        _
      $region10: #{encoder_and_memory_forward.1} parent=5 // pred_check_branch
        %179 = sbr.rel (%p176) target = $region12
      $region11: #{encoder_and_memory_forward.1} parent=5 // pred_region
        %s180 = ssub.s32 %s12, 1
        // Predicated region
        $region13: #{encoder_and_memory_forward.1} parent=11 // pred_check
          %p181 = pneg %p89
        $region14: #{encoder_and_memory_forward.1} parent=11 // pred_check_branch
          %183 = sbr.rel (%p181) target = $region16
        $region15: #{encoder_and_memory_forward.1} parent=11 // pred_region
          %s184 = smul.u32 8, %s24
          %p185 = scmp.lt.s32.totalorder %s184, 7
          %s186 = scalar_select %p185, %s184, 7
          %s187 = smul.addr %s186, 4
          %s188 = scalar_lea.vmem %s1, %s187
          %s189 = smul.u32 8, %s24
        $region16: #{encoder_and_memory_forward.1} parent=11 // pred_fallthru
          _
        // Predicated region
        $region17: #{encoder_and_memory_forward.1} parent=11 // pred_check
          %p190 = pneg %p110
        $region18: #{encoder_and_memory_forward.1} parent=11 // pred_check_branch
          %192 = sbr.rel (%p190) target = $region20
        $region19: #{encoder_and_memory_forward.1} parent=11 // pred_region
          _
        $region20: #{encoder_and_memory_forward.1} parent=11 // pred_fallthru
          _
      $region12: #{encoder_and_memory_forward.1} parent=5 // pred_fallthru
        _
      %p193 = scmp.lt.s32.totalorder %s12, 2
      // Predicated region
      $region21: #{encoder_and_memory_forward.1} parent=5 // pred_check
        %p194 = pneg %p193
      $region22: #{encoder_and_memory_forward.1} parent=5 // pred_check_branch
        %196 = sbr.rel (%p194) target = $region24
      $region23: #{encoder_and_memory_forward.1} parent=5 // pred_region
        // Predicated region
        $region25: #{encoder_and_memory_forward.1} parent=23 // pred_check
          %p197 = pneg %p57
        $region26: #{encoder_and_memory_forward.1} parent=23 // pred_check_branch
          %199 = sbr.rel (%p197) target = $region28
        $region27: #{encoder_and_memory_forward.1} parent=23 // pred_region
          %s200 = ssub.s32 1, %s20
          %s201 = smul.u32 %s21, %s200
          %s202 = smul.u32 2, %s19
          %s203 = smul.u32 8, %s201
          %p204 = scmp.lt.s32.totalorder %s202, 1
          %s205 = scalar_select %p204, %s202, 1
          %p206 = scmp.lt.s32.totalorder %s203, 7
          %s207 = scalar_select %p206, %s203, 7
          %s208 = smul.addr %s205, 8
          %s209 = sadd.s32 %s207, %s208
          %s210 = smul.addr %s209, 8
          %s211 = scalar_lea.vmem %s0, %s210
          %s212 = ssub.s32 1, %s20
          %s213 = smul.u32 %s21, %s212
          %s214 = smul.u32 2, %s19
          %s215 = smul.u32 8, %s213
        $region28: #{encoder_and_memory_forward.1} parent=23 // pred_fallthru
          _
      $region24: #{encoder_and_memory_forward.1} parent=5 // pred_fallthru
        _
      %p216 = scmp.le.s32.totalorder 1, %s12
      %p217 = scmp.lt.s32.totalorder %s12, 3
      %p218 = pnand %p216, %p217
      %p219 = pneg %p218
      // Predicated region
      $region29: #{encoder_and_memory_forward.1} parent=5 // pred_check
        _
      $region30: #{encoder_and_memory_forward.1} parent=5 // pred_check_branch
        %221 = sbr.rel (%p218) target = $region32
      $region31: #{encoder_and_memory_forward.1} parent=5 // pred_region
        %s222 = ssub.s32 %s12, 1
        %s223 = ssub.s32 1, %s23
        %s224 = smul.u32 %s24, %s223
        %s225 = smul.u32 2, %s22
        %s226 = smul.u32 8, %s224
        %p227 = scmp.lt.s32.totalorder %s225, 1
        %s228 = scalar_select %p227, %s225, 1
        %p229 = scmp.lt.s32.totalorder %s226, 7
        %s230 = scalar_select %p229, %s226, 7
        %s231 = smul.addr %s228, 8
        %s232 = sadd.s32 %s230, %s231
        %s233 = smul.addr %s232, 8
        %s234 = scalar_lea.vmem %s0, %s233
        %p235 = pneg %p63
        %p236 = pneg %p60
        %s237 = smul.u32 8, %s24
        %p238 = scmp.lt.s32.totalorder %s237, 7
        %s239 = scalar_select %p238, %s237, 7
        %s240 = smul.addr %s239, 4
        %s241 = scalar_lea.vmem %s1, %s240
        %p242 = pneg %p89
        %p243 = pneg %p86
        %p244 = pneg %p110
        %p245 = pneg %p107
        %p246 = pneg %p140
        %p247 = pneg %p137
        %s248 = smul.u32 %s24, %s23
        %s249 = smul.u32 2, %s22
        %s250 = smul.u32 8, %s248
        %p251 = scmp.lt.s32.totalorder %s249, 1
        %s252 = scalar_select %p251, %s249, 1
        %p253 = scmp.lt.s32.totalorder %s250, 7
        %s254 = scalar_select %p253, %s250, 7
        %s255 = smul.addr %s252, 8
        %s256 = sadd.s32 %s254, %s255
        %s257 = smul.addr %s256, 8
        %s258 = scalar_lea.vmem %s3, %s257
        %p259 = pneg %p166
        %p260 = pneg %p163
        %s261 = ssub.s32 1, %s23
        %s262 = smul.u32 %s24, %s261
        %s263 = smul.u32 2, %s22
        %s264 = smul.u32 8, %s262
        %p265 = scmp.lt.s32.totalorder %s263, 1
        %s266 = scalar_select %p265, %s263, 1
        %p267 = scmp.lt.s32.totalorder %s264, 7
        %s268 = scalar_select %p267, %s264, 7
        %s269 = smul.addr %s266, 8
        %s270 = sadd.s32 %s268, %s269
        %s271 = smul.addr %s270, 8
        %s272 = scalar_lea.vmem %s0, %s271
        %s273 = ssub.s32 1, %s23
        %s274 = smul.u32 %s24, %s273
        %s275 = smul.u32 2, %s22
        %s276 = smul.u32 8, %s274
        %s277 = smul.u32 8, %s24
        %p278 = scmp.lt.s32.totalorder %s277, 7
        %s279 = scalar_select %p278, %s277, 7
        %s280 = smul.addr %s279, 4
        %s281 = scalar_lea.vmem %s1, %s280
        %s282 = smul.u32 8, %s24
        %s283 = smul.u32 %s24, %s23
        %s284 = smul.u32 2, %s22
        %s285 = smul.u32 8, %s283
        %p286 = scmp.lt.s32.totalorder %s284, 1
        %s287 = scalar_select %p286, %s284, 1
        %p288 = scmp.lt.s32.totalorder %s285, 7
        %s289 = scalar_select %p288, %s285, 7
        %s290 = smul.addr %s287, 8
        %s291 = sadd.s32 %s289, %s290
        %s292 = smul.addr %s291, 8
        %s293 = scalar_lea.vmem %s3, %s292
        %s294 = smul.u32 %s24, %s23
        %s295 = smul.u32 2, %s22
        %s296 = smul.u32 8, %s294
        %s297 = smul.u32 2, %s22
        %p298 = scmp.eq.s32.totalorder %s23, 0
        // Predicated region
        $region33: #{encoder_and_memory_forward.1} parent=31 // pred_check
          %p299 = pneg %p298
        $region34: #{encoder_and_memory_forward.1} parent=31 // pred_check_branch
          %301 = sbr.rel (%p299) target = $region36
        $region35: #{encoder_and_memory_forward.1} parent=31 // pred_region
          %p302 = scmp.eq.s32.totalorder %s24, 0
          // Predicated region
          $region37: #{encoder_and_memory_forward.1} parent=35 // pred_check
            %p303 = pneg %p302
          $region38: #{encoder_and_memory_forward.1} parent=35 // pred_check_branch
            %305 = sbr.rel (%p303) target = $region40
          $region39: #{encoder_and_memory_forward.1} parent=35 // pred_region
            %306 = vst [vmem:[#allocation2] sm:$0xff] 0.0
            %307 = vst [vmem:[#allocation2 + $0x8] sm:$0xff] 0.0
            %308 = vst [vmem:[#allocation2 + $0x10] sm:$0xff] 0.0
            %309 = vst [vmem:[#allocation2 + $0x18] sm:$0xff] 0.0
            %vm310 = vcmask 7168
            %311 = vst.msk [vmem:[#allocation3] sm:$0xff] %vm310, 0.0
            %312 = vst.msk [vmem:[#allocation3 + $0x8] sm:$0xff] %vm310, 0.0
            %313 = vst [vmem:[%s293] sm:$0xff] 0.0
            %314 = vst [vmem:[%s293 + $0x8] sm:$0xff] 0.0
            %315 = vst [vmem:[%s293 + $0x10] sm:$0xff] 0.0
            %316 = vst [vmem:[%s293 + $0x18] sm:$0xff] 0.0
            %317 = vst [vmem:[%s293 + $0x20] sm:$0xff] 0.0
            %318 = vst [vmem:[%s293 + $0x28] sm:$0xff] 0.0
            %319 = vst [vmem:[%s293 + $0x30] sm:$0xff] 0.0
            %320 = vst [vmem:[%s293 + $0x38] sm:$0xff] 0.0
            %321 = vst [vmem:[%s293 + $0x40] sm:$0xff] 0.0
            %322 = vst [vmem:[%s293 + $0x48] sm:$0xff] 0.0
            %323 = vst [vmem:[%s293 + $0x50] sm:$0xff] 0.0
            %324 = vst [vmem:[%s293 + $0x58] sm:$0xff] 0.0
            %325 = vst [vmem:[%s293 + $0x60] sm:$0xff] 0.0
            %326 = vst [vmem:[%s293 + $0x68] sm:$0xff] 0.0
            %327 = vst [vmem:[%s293 + $0x70] sm:$0xff] 0.0
            %328 = vst [vmem:[%s293 + $0x78] sm:$0xff] 0.0
          $region40: #{encoder_and_memory_forward.1} parent=35 // pred_fallthru
            _
          %v329 = vld [vmem:[%s272] sm:$0xff]
          %v330 = vld [vmem:[%s272 + $0x8] sm:$0xff]
          %v331 = vld [vmem:[%s272 + $0x10] sm:$0xff]
          %v332 = vld [vmem:[%s272 + $0x18] sm:$0xff]
          %v333 = vld [vmem:[%s272 + $0x20] sm:$0xff]
          %v334 = vld [vmem:[%s272 + $0x28] sm:$0xff]
          %v335 = vld [vmem:[%s272 + $0x30] sm:$0xff]
          %v336 = vld [vmem:[%s272 + $0x38] sm:$0xff]
          %v337 = vld [vmem:[%s272 + $0x40] sm:$0xff]
          %v338 = vld [vmem:[%s272 + $0x48] sm:$0xff]
          %v339 = vld [vmem:[%s272 + $0x50] sm:$0xff]
          %v340 = vld [vmem:[%s272 + $0x58] sm:$0xff]
          %v341 = vld [vmem:[%s272 + $0x60] sm:$0xff]
          %v342 = vld [vmem:[%s272 + $0x68] sm:$0xff]
          %v343 = vld [vmem:[%s272 + $0x70] sm:$0xff]
          %v344 = vld [vmem:[%s272 + $0x78] sm:$0xff]
          %v345 = vld [vmem:[#allocation2] sm:$0xff]
          %v346 = vld [vmem:[#allocation2 + $0x8] sm:$0xff]
          %v347 = vld [vmem:[#allocation2 + $0x10] sm:$0xff]
          %v348 = vld [vmem:[#allocation2 + $0x18] sm:$0xff]
          %v349 = vpack.c.bf16 %v337, %v329
          %v350 = vpack.c.bf16 %v338, %v330
          %v351 = vpack.c.bf16 %v339, %v331
          %v352 = vpack.c.bf16 %v340, %v332
          %v353 = vpack.c.bf16 %v341, %v333
          %v354 = vpack.c.bf16 %v342, %v334
          %v355 = vpack.c.bf16 %v343, %v335
          %v356 = vpack.c.bf16 %v344, %v336
          %v357 = vld [vmem:[%s281] sm:$0xff]
          %v358 = vld [vmem:[%s281 + $0x8] sm:$0xff]
          %v359 = vld [vmem:[%s281 + $0x10] sm:$0xff]
          %v360 = vld [vmem:[%s281 + $0x18] sm:$0xff]
          %v361 = vld [vmem:[%s281 + $0x20] sm:$0xff]
          %v362 = vld [vmem:[%s281 + $0x28] sm:$0xff]
          %v363 = vld [vmem:[%s281 + $0x30] sm:$0xff]
          %v364 = vld [vmem:[%s281 + $0x38] sm:$0xff]
          %v365 = vld [vmem:[%s281 + $0x40] sm:$0xff]
          %v366 = vld [vmem:[%s281 + $0x48] sm:$0xff]
          %v367 = vld [vmem:[%s281 + $0x50] sm:$0xff]
          %v368 = vld [vmem:[%s281 + $0x58] sm:$0xff]
          %v369 = vld [vmem:[%s281 + $0x60] sm:$0xff]
          %v370 = vld [vmem:[%s281 + $0x68] sm:$0xff]
          %v371 = vld [vmem:[%s281 + $0x70] sm:$0xff]
          %v372 = vld [vmem:[%s281 + $0x78] sm:$0xff]
          %v373 = vld [vmem:[%s281 + $0x80] sm:$0xff]
          %v374 = vld [vmem:[%s281 + $0x88] sm:$0xff]
          %v375 = vld [vmem:[%s281 + $0x90] sm:$0xff]
          %v376 = vld [vmem:[%s281 + $0x98] sm:$0xff]
          %v377 = vld [vmem:[%s281 + $0xa0] sm:$0xff]
          %v378 = vld [vmem:[%s281 + $0xa8] sm:$0xff]
          %v379 = vld [vmem:[%s281 + $0xb0] sm:$0xff]
          %v380 = vld [vmem:[%s281 + $0xb8] sm:$0xff]
          %v381 = vld [vmem:[%s281 + $0xc0] sm:$0xff]
          %v382 = vld [vmem:[%s281 + $0xc8] sm:$0xff]
          %v383 = vld [vmem:[%s281 + $0xd0] sm:$0xff]
          %v384 = vld [vmem:[%s281 + $0xd8] sm:$0xff]
          %v385 = vld [vmem:[%s281 + $0xe0] sm:$0xff]
          %v386 = vld [vmem:[%s281 + $0xe8] sm:$0xff]
          %v387 = vld [vmem:[%s281 + $0xf0] sm:$0xff]
          %v388 = vld [vmem:[%s281 + $0xf8] sm:$0xff]
          %v389 = vld [vmem:[%s281 + $0x100] sm:$0xff]
          %v390 = vld [vmem:[%s281 + $0x108] sm:$0xff]
          %v391 = vld [vmem:[%s281 + $0x110] sm:$0xff]
          %v392 = vld [vmem:[%s281 + $0x118] sm:$0xff]
          %v393 = vld [vmem:[%s281 + $0x120] sm:$0xff]
          %v394 = vld [vmem:[%s281 + $0x128] sm:$0xff]
          %v395 = vld [vmem:[%s281 + $0x130] sm:$0xff]
          %v396 = vld [vmem:[%s281 + $0x138] sm:$0xff]
          %v397 = vld [vmem:[%s281 + $0x140] sm:$0xff]
          %v398 = vld [vmem:[%s281 + $0x148] sm:$0xff]
          %v399 = vld [vmem:[%s281 + $0x150] sm:$0xff]
          %v400 = vld [vmem:[%s281 + $0x158] sm:$0xff]
          %v401 = vld [vmem:[%s281 + $0x160] sm:$0xff]
          %v402 = vld [vmem:[%s281 + $0x168] sm:$0xff]
          %v403 = vld [vmem:[%s281 + $0x170] sm:$0xff]
          %v404 = vld [vmem:[%s281 + $0x178] sm:$0xff]
          %v405 = vld [vmem:[%s281 + $0x180] sm:$0xff]
          %v406 = vld [vmem:[%s281 + $0x188] sm:$0xff]
          %v407 = vld [vmem:[%s281 + $0x190] sm:$0xff]
          %v408 = vld [vmem:[%s281 + $0x198] sm:$0xff]
          %v409 = vld [vmem:[%s281 + $0x1a0] sm:$0xff]
          %v410 = vld [vmem:[%s281 + $0x1a8] sm:$0xff]
          %v411 = vld [vmem:[%s281 + $0x1b0] sm:$0xff]
          %v412 = vld [vmem:[%s281 + $0x1b8] sm:$0xff]
          %v413 = vld [vmem:[%s281 + $0x1c0] sm:$0xff]
          %v414 = vld [vmem:[%s281 + $0x1c8] sm:$0xff]
          %v415 = vld [vmem:[%s281 + $0x1d0] sm:$0xff]
          %v416 = vld [vmem:[%s281 + $0x1d8] sm:$0xff]
          %v417 = vld [vmem:[%s281 + $0x1e0] sm:$0xff]
          %v418 = vld [vmem:[%s281 + $0x1e8] sm:$0xff]
          %v419 = vld [vmem:[%s281 + $0x1f0] sm:$0xff]
          %v420 = vld [vmem:[%s281 + $0x1f8] sm:$0xff]
          %v421 = vld [vmem:[%s281 + $0x200] sm:$0xff]
          %v422 = vld [vmem:[%s281 + $0x208] sm:$0xff]
          %v423 = vld [vmem:[%s281 + $0x210] sm:$0xff]
          %v424 = vld [vmem:[%s281 + $0x218] sm:$0xff]
          %v425 = vld [vmem:[%s281 + $0x220] sm:$0xff]
          %v426 = vld [vmem:[%s281 + $0x228] sm:$0xff]
          %v427 = vld [vmem:[%s281 + $0x230] sm:$0xff]
          %v428 = vld [vmem:[%s281 + $0x238] sm:$0xff]
          %v429 = vld [vmem:[%s281 + $0x240] sm:$0xff]
          %v430 = vld [vmem:[%s281 + $0x248] sm:$0xff]
          %v431 = vld [vmem:[%s281 + $0x250] sm:$0xff]
          %v432 = vld [vmem:[%s281 + $0x258] sm:$0xff]
          %v433 = vld [vmem:[%s281 + $0x260] sm:$0xff]
          %v434 = vld [vmem:[%s281 + $0x268] sm:$0xff]
          %v435 = vld [vmem:[%s281 + $0x270] sm:$0xff]
          %v436 = vld [vmem:[%s281 + $0x278] sm:$0xff]
          %v437 = vld [vmem:[%s281 + $0x280] sm:$0xff]
          %v438 = vld [vmem:[%s281 + $0x288] sm:$0xff]
          %v439 = vld [vmem:[%s281 + $0x290] sm:$0xff]
          %v440 = vld [vmem:[%s281 + $0x298] sm:$0xff]
          %v441 = vld [vmem:[%s281 + $0x2a0] sm:$0xff]
          %v442 = vld [vmem:[%s281 + $0x2a8] sm:$0xff]
          %v443 = vld [vmem:[%s281 + $0x2b0] sm:$0xff]
          %v444 = vld [vmem:[%s281 + $0x2b8] sm:$0xff]
          %v445 = vld [vmem:[%s281 + $0x2c0] sm:$0xff]
          %v446 = vld [vmem:[%s281 + $0x2c8] sm:$0xff]
          %v447 = vld [vmem:[%s281 + $0x2d0] sm:$0xff]
          %v448 = vld [vmem:[%s281 + $0x2d8] sm:$0xff]
          %v449 = vld [vmem:[%s281 + $0x2e0] sm:$0xff]
          %v450 = vld [vmem:[%s281 + $0x2e8] sm:$0xff]
          %v451 = vld [vmem:[%s281 + $0x2f0] sm:$0xff]
          %v452 = vld [vmem:[%s281 + $0x2f8] sm:$0xff]
          %v453 = vld [vmem:[%s281 + $0x300] sm:$0xff]
          %v454 = vld [vmem:[%s281 + $0x308] sm:$0xff]
          %v455 = vld [vmem:[%s281 + $0x310] sm:$0xff]
          %v456 = vld [vmem:[%s281 + $0x318] sm:$0xff]
          %v457 = vld [vmem:[%s281 + $0x320] sm:$0xff]
          %v458 = vld [vmem:[%s281 + $0x328] sm:$0xff]
          %v459 = vld [vmem:[%s281 + $0x330] sm:$0xff]
          %v460 = vld [vmem:[%s281 + $0x338] sm:$0xff]
          %v461 = vld [vmem:[%s281 + $0x340] sm:$0xff]
          %v462 = vld [vmem:[%s281 + $0x348] sm:$0xff]
          %v463 = vld [vmem:[%s281 + $0x350] sm:$0xff]
          %v464 = vld [vmem:[%s281 + $0x358] sm:$0xff]
          %v465 = vld [vmem:[%s281 + $0x360] sm:$0xff]
          %v466 = vld [vmem:[%s281 + $0x368] sm:$0xff]
          %v467 = vld [vmem:[%s281 + $0x370] sm:$0xff]
          %v468 = vld [vmem:[%s281 + $0x378] sm:$0xff]
          %v469 = vld [vmem:[%s281 + $0x380] sm:$0xff]
          %v470 = vld [vmem:[%s281 + $0x388] sm:$0xff]
          %v471 = vld [vmem:[%s281 + $0x390] sm:$0xff]
          %v472 = vld [vmem:[%s281 + $0x398] sm:$0xff]
          %v473 = vld [vmem:[%s281 + $0x3a0] sm:$0xff]
          %v474 = vld [vmem:[%s281 + $0x3a8] sm:$0xff]
          %v475 = vld [vmem:[%s281 + $0x3b0] sm:$0xff]
          %v476 = vld [vmem:[%s281 + $0x3b8] sm:$0xff]
          %v477 = vld [vmem:[%s281 + $0x3c0] sm:$0xff]
          %v478 = vld [vmem:[%s281 + $0x3c8] sm:$0xff]
          %v479 = vld [vmem:[%s281 + $0x3d0] sm:$0xff]
          %v480 = vld [vmem:[%s281 + $0x3d8] sm:$0xff]
          %v481 = vld [vmem:[%s281 + $0x3e0] sm:$0xff]
          %v482 = vld [vmem:[%s281 + $0x3e8] sm:$0xff]
          %v483 = vld [vmem:[%s281 + $0x3f0] sm:$0xff]
          %v484 = vld [vmem:[%s281 + $0x3f8] sm:$0xff]
          %v613 = vunpack.c.l.b16 %v357
          %v614 = vunpack.c.h.b16 %v357
          %v615 = vunpack.c.l.b16 %v358
          %v616 = vunpack.c.h.b16 %v358
          %v617 = vunpack.c.l.b16 %v359
          %v618 = vunpack.c.h.b16 %v359
          %v619 = vunpack.c.l.b16 %v360
          %v620 = vunpack.c.h.b16 %v360
          %v621 = vunpack.c.l.b16 %v361
          %v622 = vunpack.c.h.b16 %v361
          %v623 = vunpack.c.l.b16 %v362
          %v624 = vunpack.c.h.b16 %v362
          %v625 = vunpack.c.l.b16 %v363
          %v626 = vunpack.c.h.b16 %v363
          %v627 = vunpack.c.l.b16 %v364
          %v628 = vunpack.c.h.b16 %v364
          %v629 = vunpack.c.l.b16 %v365
          %v630 = vunpack.c.h.b16 %v365
          %v631 = vunpack.c.l.b16 %v366
          %v632 = vunpack.c.h.b16 %v366
          %v633 = vunpack.c.l.b16 %v367
          %v634 = vunpack.c.h.b16 %v367
          %v635 = vunpack.c.l.b16 %v368
          %v636 = vunpack.c.h.b16 %v368
          %v637 = vunpack.c.l.b16 %v369
          %v638 = vunpack.c.h.b16 %v369
          %v639 = vunpack.c.l.b16 %v370
          %v640 = vunpack.c.h.b16 %v370
          %v641 = vunpack.c.l.b16 %v371
          %v642 = vunpack.c.h.b16 %v371
          %v643 = vunpack.c.l.b16 %v372
          %v644 = vunpack.c.h.b16 %v372
          %v645 = vunpack.c.l.b16 %v373
          %v646 = vunpack.c.h.b16 %v373
          %v647 = vunpack.c.l.b16 %v374
          %v648 = vunpack.c.h.b16 %v374
          %v649 = vunpack.c.l.b16 %v375
          %v650 = vunpack.c.h.b16 %v375
          %v651 = vunpack.c.l.b16 %v376
          %v652 = vunpack.c.h.b16 %v376
          %v653 = vunpack.c.l.b16 %v377
          %v654 = vunpack.c.h.b16 %v377
          %v655 = vunpack.c.l.b16 %v378
          %v656 = vunpack.c.h.b16 %v378
          %v657 = vunpack.c.l.b16 %v379
          %v658 = vunpack.c.h.b16 %v379
          %v659 = vunpack.c.l.b16 %v380
          %v660 = vunpack.c.h.b16 %v380
          %v661 = vunpack.c.l.b16 %v381
          %v662 = vunpack.c.h.b16 %v381
          %v663 = vunpack.c.l.b16 %v382
          %v664 = vunpack.c.h.b16 %v382
          %v665 = vunpack.c.l.b16 %v383
          %v666 = vunpack.c.h.b16 %v383
          %v667 = vunpack.c.l.b16 %v384
          %v668 = vunpack.c.h.b16 %v384
          %v669 = vunpack.c.l.b16 %v385
          %v670 = vunpack.c.h.b16 %v385
          %v671 = vunpack.c.l.b16 %v386
          %v672 = vunpack.c.h.b16 %v386
          %v673 = vunpack.c.l.b16 %v387
          %v674 = vunpack.c.h.b16 %v387
          %v675 = vunpack.c.l.b16 %v388
          %v676 = vunpack.c.h.b16 %v388
          %v677 = vunpack.c.l.b16 %v389
          %v678 = vunpack.c.h.b16 %v389
          %v679 = vunpack.c.l.b16 %v390
          %v680 = vunpack.c.h.b16 %v390
          %v681 = vunpack.c.l.b16 %v391
          %v682 = vunpack.c.h.b16 %v391
          %v683 = vunpack.c.l.b16 %v392
          %v684 = vunpack.c.h.b16 %v392
          %v685 = vunpack.c.l.b16 %v393
          %v686 = vunpack.c.h.b16 %v393
          %v687 = vunpack.c.l.b16 %v394
          %v688 = vunpack.c.h.b16 %v394
          %v689 = vunpack.c.l.b16 %v395
          %v690 = vunpack.c.h.b16 %v395
          %v691 = vunpack.c.l.b16 %v396
          %v692 = vunpack.c.h.b16 %v396
          %v693 = vunpack.c.l.b16 %v397
          %v694 = vunpack.c.h.b16 %v397
          %v695 = vunpack.c.l.b16 %v398
          %v696 = vunpack.c.h.b16 %v398
          %v697 = vunpack.c.l.b16 %v399
          %v698 = vunpack.c.h.b16 %v399
          %v699 = vunpack.c.l.b16 %v400
          %v700 = vunpack.c.h.b16 %v400
          %v701 = vunpack.c.l.b16 %v401
          %v702 = vunpack.c.h.b16 %v401
          %v703 = vunpack.c.l.b16 %v402
          %v704 = vunpack.c.h.b16 %v402
          %v705 = vunpack.c.l.b16 %v403
          %v706 = vunpack.c.h.b16 %v403
          %v707 = vunpack.c.l.b16 %v404
          %v708 = vunpack.c.h.b16 %v404
          %v709 = vunpack.c.l.b16 %v405
          %v710 = vunpack.c.h.b16 %v405
          %v711 = vunpack.c.l.b16 %v406
          %v712 = vunpack.c.h.b16 %v406
          %v713 = vunpack.c.l.b16 %v407
          %v714 = vunpack.c.h.b16 %v407
          %v715 = vunpack.c.l.b16 %v408
          %v716 = vunpack.c.h.b16 %v408
          %v717 = vunpack.c.l.b16 %v409
          %v718 = vunpack.c.h.b16 %v409
          %v719 = vunpack.c.l.b16 %v410
          %v720 = vunpack.c.h.b16 %v410
          %v721 = vunpack.c.l.b16 %v411
          %v722 = vunpack.c.h.b16 %v411
          %v723 = vunpack.c.l.b16 %v412
          %v724 = vunpack.c.h.b16 %v412
          %v725 = vunpack.c.l.b16 %v413
          %v726 = vunpack.c.h.b16 %v413
          %v727 = vunpack.c.l.b16 %v414
          %v728 = vunpack.c.h.b16 %v414
          %v729 = vunpack.c.l.b16 %v415
          %v730 = vunpack.c.h.b16 %v415
          %v731 = vunpack.c.l.b16 %v416
          %v732 = vunpack.c.h.b16 %v416
          %v733 = vunpack.c.l.b16 %v417
          %v734 = vunpack.c.h.b16 %v417
          %v735 = vunpack.c.l.b16 %v418
          %v736 = vunpack.c.h.b16 %v418
          %v737 = vunpack.c.l.b16 %v419
          %v738 = vunpack.c.h.b16 %v419
          %v739 = vunpack.c.l.b16 %v420
          %v740 = vunpack.c.h.b16 %v420
          %v741 = vunpack.c.l.b16 %v421
          %v742 = vunpack.c.h.b16 %v421
          %v743 = vunpack.c.l.b16 %v422
          %v744 = vunpack.c.h.b16 %v422
          %v745 = vunpack.c.l.b16 %v423
          %v746 = vunpack.c.h.b16 %v423
          %v747 = vunpack.c.l.b16 %v424
          %v748 = vunpack.c.h.b16 %v424
          %v749 = vunpack.c.l.b16 %v425
          %v750 = vunpack.c.h.b16 %v425
          %v751 = vunpack.c.l.b16 %v426
          %v752 = vunpack.c.h.b16 %v426
          %v753 = vunpack.c.l.b16 %v427
          %v754 = vunpack.c.h.b16 %v427
          %v755 = vunpack.c.l.b16 %v428
          %v756 = vunpack.c.h.b16 %v428
          %v757 = vunpack.c.l.b16 %v429
          %v758 = vunpack.c.h.b16 %v429
          %v759 = vunpack.c.l.b16 %v430
          %v760 = vunpack.c.h.b16 %v430
          %v761 = vunpack.c.l.b16 %v431
          %v762 = vunpack.c.h.b16 %v431
          %v763 = vunpack.c.l.b16 %v432
          %v764 = vunpack.c.h.b16 %v432
          %v765 = vunpack.c.l.b16 %v433
          %v766 = vunpack.c.h.b16 %v433
          %v767 = vunpack.c.l.b16 %v434
          %v768 = vunpack.c.h.b16 %v434
          %v769 = vunpack.c.l.b16 %v435
          %v770 = vunpack.c.h.b16 %v435
          %v771 = vunpack.c.l.b16 %v436
          %v772 = vunpack.c.h.b16 %v436
          %v773 = vunpack.c.l.b16 %v437
          %v774 = vunpack.c.h.b16 %v437
          %v775 = vunpack.c.l.b16 %v438
          %v776 = vunpack.c.h.b16 %v438
          %v777 = vunpack.c.l.b16 %v439
          %v778 = vunpack.c.h.b16 %v439
          %v779 = vunpack.c.l.b16 %v440
          %v780 = vunpack.c.h.b16 %v440
          %v781 = vunpack.c.l.b16 %v441
          %v782 = vunpack.c.h.b16 %v441
          %v783 = vunpack.c.l.b16 %v442
          %v784 = vunpack.c.h.b16 %v442
          %v785 = vunpack.c.l.b16 %v443
          %v786 = vunpack.c.h.b16 %v443
          %v787 = vunpack.c.l.b16 %v444
          %v788 = vunpack.c.h.b16 %v444
          %v789 = vunpack.c.l.b16 %v445
          %v790 = vunpack.c.h.b16 %v445
          %v791 = vunpack.c.l.b16 %v446
          %v792 = vunpack.c.h.b16 %v446
          %v793 = vunpack.c.l.b16 %v447
          %v794 = vunpack.c.h.b16 %v447
          %v795 = vunpack.c.l.b16 %v448
          %v796 = vunpack.c.h.b16 %v448
          %v797 = vunpack.c.l.b16 %v449
          %v798 = vunpack.c.h.b16 %v449
          %v799 = vunpack.c.l.b16 %v450
          %v800 = vunpack.c.h.b16 %v450
          %v801 = vunpack.c.l.b16 %v451
          %v802 = vunpack.c.h.b16 %v451
          %v803 = vunpack.c.l.b16 %v452
          %v804 = vunpack.c.h.b16 %v452
          %v805 = vunpack.c.l.b16 %v453
          %v806 = vunpack.c.h.b16 %v453
          %v807 = vunpack.c.l.b16 %v454
          %v808 = vunpack.c.h.b16 %v454
          %v809 = vunpack.c.l.b16 %v455
          %v810 = vunpack.c.h.b16 %v455
          %v811 = vunpack.c.l.b16 %v456
          %v812 = vunpack.c.h.b16 %v456
          %v813 = vunpack.c.l.b16 %v457
          %v814 = vunpack.c.h.b16 %v457
          %v815 = vunpack.c.l.b16 %v458
          %v816 = vunpack.c.h.b16 %v458
          %v817 = vunpack.c.l.b16 %v459
          %v818 = vunpack.c.h.b16 %v459
          %v819 = vunpack.c.l.b16 %v460
          %v820 = vunpack.c.h.b16 %v460
          %v821 = vunpack.c.l.b16 %v461
          %v822 = vunpack.c.h.b16 %v461
          %v823 = vunpack.c.l.b16 %v462
          %v824 = vunpack.c.h.b16 %v462
          %v825 = vunpack.c.l.b16 %v463
          %v826 = vunpack.c.h.b16 %v463
          %v827 = vunpack.c.l.b16 %v464
          %v828 = vunpack.c.h.b16 %v464
          %v829 = vunpack.c.l.b16 %v465
          %v830 = vunpack.c.h.b16 %v465
          %v831 = vunpack.c.l.b16 %v466
          %v832 = vunpack.c.h.b16 %v466
          %v833 = vunpack.c.l.b16 %v467
          %v834 = vunpack.c.h.b16 %v467
          %v835 = vunpack.c.l.b16 %v468
          %v836 = vunpack.c.h.b16 %v468
          %v837 = vunpack.c.l.b16 %v469
          %v838 = vunpack.c.h.b16 %v469
          %v839 = vunpack.c.l.b16 %v470
          %v840 = vunpack.c.h.b16 %v470
          %v841 = vunpack.c.l.b16 %v471
          %v842 = vunpack.c.h.b16 %v471
          %v843 = vunpack.c.l.b16 %v472
          %v844 = vunpack.c.h.b16 %v472
          %v845 = vunpack.c.l.b16 %v473
          %v846 = vunpack.c.h.b16 %v473
          %v847 = vunpack.c.l.b16 %v474
          %v848 = vunpack.c.h.b16 %v474
          %v849 = vunpack.c.l.b16 %v475
          %v850 = vunpack.c.h.b16 %v475
          %v851 = vunpack.c.l.b16 %v476
          %v852 = vunpack.c.h.b16 %v476
          %v853 = vunpack.c.l.b16 %v477
          %v854 = vunpack.c.h.b16 %v477
          %v855 = vunpack.c.l.b16 %v478
          %v856 = vunpack.c.h.b16 %v478
          %v857 = vunpack.c.l.b16 %v479
          %v858 = vunpack.c.h.b16 %v479
          %v859 = vunpack.c.l.b16 %v480
          %v860 = vunpack.c.h.b16 %v480
          %v861 = vunpack.c.l.b16 %v481
          %v862 = vunpack.c.h.b16 %v481
          %v863 = vunpack.c.l.b16 %v482
          %v864 = vunpack.c.h.b16 %v482
          %v865 = vunpack.c.l.b16 %v483
          %v866 = vunpack.c.h.b16 %v483
          %v867 = vunpack.c.l.b16 %v484
          %v868 = vunpack.c.h.b16 %v484
          %v869 = vpack.c.b16 %v621, %v613
          %v870 = vpack.c.b16 %v622, %v614
          %v871 = vpack.c.b16 %v623, %v615
          %v872 = vpack.c.b16 %v624, %v616
          %v873 = vpack.c.b16 %v625, %v617
          %v874 = vpack.c.b16 %v626, %v618
          %v875 = vpack.c.b16 %v627, %v619
          %v876 = vpack.c.b16 %v628, %v620
          %v877 = vpack.c.b16 %v637, %v629
          %v878 = vpack.c.b16 %v638, %v630
          %v879 = vpack.c.b16 %v639, %v631
          %v880 = vpack.c.b16 %v640, %v632
          %v881 = vpack.c.b16 %v641, %v633
          %v882 = vpack.c.b16 %v642, %v634
          %v883 = vpack.c.b16 %v643, %v635
          %v884 = vpack.c.b16 %v644, %v636
          %v885 = vpack.c.b16 %v653, %v645
          %v886 = vpack.c.b16 %v654, %v646
          %v887 = vpack.c.b16 %v655, %v647
          %v888 = vpack.c.b16 %v656, %v648
          %v889 = vpack.c.b16 %v657, %v649
          %v890 = vpack.c.b16 %v658, %v650
          %v891 = vpack.c.b16 %v659, %v651
          %v892 = vpack.c.b16 %v660, %v652
          %v893 = vpack.c.b16 %v669, %v661
          %v894 = vpack.c.b16 %v670, %v662
          %v895 = vpack.c.b16 %v671, %v663
          %v896 = vpack.c.b16 %v672, %v664
          %v897 = vpack.c.b16 %v673, %v665
          %v898 = vpack.c.b16 %v674, %v666
          %v899 = vpack.c.b16 %v675, %v667
          %v900 = vpack.c.b16 %v676, %v668
          %v901 = vpack.c.b16 %v685, %v677
          %v902 = vpack.c.b16 %v686, %v678
          %v903 = vpack.c.b16 %v687, %v679
          %v904 = vpack.c.b16 %v688, %v680
          %v905 = vpack.c.b16 %v689, %v681
          %v906 = vpack.c.b16 %v690, %v682
          %v907 = vpack.c.b16 %v691, %v683
          %v908 = vpack.c.b16 %v692, %v684
          %v909 = vpack.c.b16 %v701, %v693
          %v910 = vpack.c.b16 %v702, %v694
          %v911 = vpack.c.b16 %v703, %v695
          %v912 = vpack.c.b16 %v704, %v696
          %v913 = vpack.c.b16 %v705, %v697
          %v914 = vpack.c.b16 %v706, %v698
          %v915 = vpack.c.b16 %v707, %v699
          %v916 = vpack.c.b16 %v708, %v700
          %v917 = vpack.c.b16 %v717, %v709
          %v918 = vpack.c.b16 %v718, %v710
          %v919 = vpack.c.b16 %v719, %v711
          %v920 = vpack.c.b16 %v720, %v712
          %v921 = vpack.c.b16 %v721, %v713
          %v922 = vpack.c.b16 %v722, %v714
          %v923 = vpack.c.b16 %v723, %v715
          %v924 = vpack.c.b16 %v724, %v716
          %v925 = vpack.c.b16 %v733, %v725
          %v926 = vpack.c.b16 %v734, %v726
          %v927 = vpack.c.b16 %v735, %v727
          %v928 = vpack.c.b16 %v736, %v728
          %v929 = vpack.c.b16 %v737, %v729
          %v930 = vpack.c.b16 %v738, %v730
          %v931 = vpack.c.b16 %v739, %v731
          %v932 = vpack.c.b16 %v740, %v732
          %v933 = vpack.c.b16 %v749, %v741
          %v934 = vpack.c.b16 %v750, %v742
          %v935 = vpack.c.b16 %v751, %v743
          %v936 = vpack.c.b16 %v752, %v744
          %v937 = vpack.c.b16 %v753, %v745
          %v938 = vpack.c.b16 %v754, %v746
          %v939 = vpack.c.b16 %v755, %v747
          %v940 = vpack.c.b16 %v756, %v748
          %v941 = vpack.c.b16 %v765, %v757
          %v942 = vpack.c.b16 %v766, %v758
          %v943 = vpack.c.b16 %v767, %v759
          %v944 = vpack.c.b16 %v768, %v760
          %v945 = vpack.c.b16 %v769, %v761
          %v946 = vpack.c.b16 %v770, %v762
          %v947 = vpack.c.b16 %v771, %v763
          %v948 = vpack.c.b16 %v772, %v764
          %v949 = vpack.c.b16 %v781, %v773
          %v950 = vpack.c.b16 %v782, %v774
          %v951 = vpack.c.b16 %v783, %v775
          %v952 = vpack.c.b16 %v784, %v776
          %v953 = vpack.c.b16 %v785, %v777
          %v954 = vpack.c.b16 %v786, %v778
          %v955 = vpack.c.b16 %v787, %v779
          %v956 = vpack.c.b16 %v788, %v780
          %v957 = vpack.c.b16 %v797, %v789
          %v958 = vpack.c.b16 %v798, %v790
          %v959 = vpack.c.b16 %v799, %v791
          %v960 = vpack.c.b16 %v800, %v792
          %v961 = vpack.c.b16 %v801, %v793
          %v962 = vpack.c.b16 %v802, %v794
          %v963 = vpack.c.b16 %v803, %v795
          %v964 = vpack.c.b16 %v804, %v796
          %v965 = vpack.c.b16 %v813, %v805
          %v966 = vpack.c.b16 %v814, %v806
          %v967 = vpack.c.b16 %v815, %v807
          %v968 = vpack.c.b16 %v816, %v808
          %v969 = vpack.c.b16 %v817, %v809
          %v970 = vpack.c.b16 %v818, %v810
          %v971 = vpack.c.b16 %v819, %v811
          %v972 = vpack.c.b16 %v820, %v812
          %v973 = vpack.c.b16 %v829, %v821
          %v974 = vpack.c.b16 %v830, %v822
          %v975 = vpack.c.b16 %v831, %v823
          %v976 = vpack.c.b16 %v832, %v824
          %v977 = vpack.c.b16 %v833, %v825
          %v978 = vpack.c.b16 %v834, %v826
          %v979 = vpack.c.b16 %v835, %v827
          %v980 = vpack.c.b16 %v836, %v828
          %v981 = vpack.c.b16 %v845, %v837
          %v982 = vpack.c.b16 %v846, %v838
          %v983 = vpack.c.b16 %v847, %v839
          %v984 = vpack.c.b16 %v848, %v840
          %v985 = vpack.c.b16 %v849, %v841
          %v986 = vpack.c.b16 %v850, %v842
          %v987 = vpack.c.b16 %v851, %v843
          %v988 = vpack.c.b16 %v852, %v844
          %v989 = vpack.c.b16 %v861, %v853
          %v990 = vpack.c.b16 %v862, %v854
          %v991 = vpack.c.b16 %v863, %v855
          %v992 = vpack.c.b16 %v864, %v856
          %v993 = vpack.c.b16 %v865, %v857
          %v994 = vpack.c.b16 %v866, %v858
          %v995 = vpack.c.b16 %v867, %v859
          %v996 = vpack.c.b16 %v868, %v860
          %1125 = vmatpush.bf16.xpose.msra.mxu0 %v925
          %1126 = vmatpush.bf16.xpose.msra.mxu0 %v917
          %1127 = vmatpush.bf16.xpose.msra.mxu0 %v909
          %1128 = vmatpush.bf16.xpose.msra.mxu0 %v901
          %1129 = vmatpush.bf16.xpose.msra.mxu0 %v893
          %1130 = vmatpush.bf16.xpose.msra.mxu0 %v885
          %1131 = vmatpush.bf16.xpose.msra.mxu0 %v877
          %1132 = vmatpush.bf16.xpose.msra.mxu0 %v869
          %1133 = vmatmul.bf16.gmra.mxu0 %v349
          %v1134 = vpop.f32.mrf.mxu0
          %v1135 = vadd.f32 0.0, %v1134
          %v1136 = vpop.f32.mrf.mxu0
          %v1137 = vadd.f32 0.0, %v1136
          %1138 = vdwg.mxu0
          %1139 = vmatpush.bf16.xpose.msra.mxu0 %v926
          %1140 = vmatpush.bf16.xpose.msra.mxu0 %v918
          %1141 = vmatpush.bf16.xpose.msra.mxu0 %v910
          %1142 = vmatpush.bf16.xpose.msra.mxu0 %v902
          %1143 = vmatpush.bf16.xpose.msra.mxu0 %v894
          %1144 = vmatpush.bf16.xpose.msra.mxu0 %v886
          %1145 = vmatpush.bf16.xpose.msra.mxu0 %v878
          %1146 = vmatpush.bf16.xpose.msra.mxu0 %v870
          %1147 = vmatmul.bf16.gmra.mxu0 %v350
          %v1148 = vpop.f32.mrf.mxu0
          %v1149 = vadd.f32 %v1135, %v1148
          %v1150 = vpop.f32.mrf.mxu0
          %v1151 = vadd.f32 %v1137, %v1150
          %1152 = vdwg.mxu0
          %1153 = vmatpush.bf16.xpose.msra.mxu0 %v927
          %1154 = vmatpush.bf16.xpose.msra.mxu0 %v919
          %1155 = vmatpush.bf16.xpose.msra.mxu0 %v911
          %1156 = vmatpush.bf16.xpose.msra.mxu0 %v903
          %1157 = vmatpush.bf16.xpose.msra.mxu0 %v895
          %1158 = vmatpush.bf16.xpose.msra.mxu0 %v887
          %1159 = vmatpush.bf16.xpose.msra.mxu0 %v879
          %1160 = vmatpush.bf16.xpose.msra.mxu0 %v871
          %1161 = vmatmul.bf16.gmra.mxu0 %v351
          %v1162 = vpop.f32.mrf.mxu0
          %v1163 = vadd.f32 %v1149, %v1162
          %v1164 = vpop.f32.mrf.mxu0
          %v1165 = vadd.f32 %v1151, %v1164
          %1166 = vdwg.mxu0
          %1167 = vmatpush.bf16.xpose.msra.mxu0 %v928
          %1168 = vmatpush.bf16.xpose.msra.mxu0 %v920
          %1169 = vmatpush.bf16.xpose.msra.mxu0 %v912
          %1170 = vmatpush.bf16.xpose.msra.mxu0 %v904
          %1171 = vmatpush.bf16.xpose.msra.mxu0 %v896
          %1172 = vmatpush.bf16.xpose.msra.mxu0 %v888
          %1173 = vmatpush.bf16.xpose.msra.mxu0 %v880
          %1174 = vmatpush.bf16.xpose.msra.mxu0 %v872
          %1175 = vmatmul.bf16.gmra.mxu0 %v352
          %v1176 = vpop.f32.mrf.mxu0
          %v1177 = vadd.f32 %v1163, %v1176
          %v1178 = vpop.f32.mrf.mxu0
          %v1179 = vadd.f32 %v1165, %v1178
          %1180 = vdwg.mxu0
          %1181 = vmatpush.bf16.xpose.msra.mxu0 %v929
          %1182 = vmatpush.bf16.xpose.msra.mxu0 %v921
          %1183 = vmatpush.bf16.xpose.msra.mxu0 %v913
          %1184 = vmatpush.bf16.xpose.msra.mxu0 %v905
          %1185 = vmatpush.bf16.xpose.msra.mxu0 %v897
          %1186 = vmatpush.bf16.xpose.msra.mxu0 %v889
          %1187 = vmatpush.bf16.xpose.msra.mxu0 %v881
          %1188 = vmatpush.bf16.xpose.msra.mxu0 %v873
          %1189 = vmatmul.bf16.gmra.mxu0 %v353
          %v1190 = vpop.f32.mrf.mxu0
          %v1191 = vadd.f32 %v1177, %v1190
          %v1192 = vpop.f32.mrf.mxu0
          %v1193 = vadd.f32 %v1179, %v1192
          %1194 = vdwg.mxu0
          %1195 = vmatpush.bf16.xpose.msra.mxu0 %v930
          %1196 = vmatpush.bf16.xpose.msra.mxu0 %v922
          %1197 = vmatpush.bf16.xpose.msra.mxu0 %v914
          %1198 = vmatpush.bf16.xpose.msra.mxu0 %v906
          %1199 = vmatpush.bf16.xpose.msra.mxu0 %v898
          %1200 = vmatpush.bf16.xpose.msra.mxu0 %v890
          %1201 = vmatpush.bf16.xpose.msra.mxu0 %v882
          %1202 = vmatpush.bf16.xpose.msra.mxu0 %v874
          %1203 = vmatmul.bf16.gmra.mxu0 %v354
          %v1204 = vpop.f32.mrf.mxu0
          %v1205 = vadd.f32 %v1191, %v1204
          %v1206 = vpop.f32.mrf.mxu0
          %v1207 = vadd.f32 %v1193, %v1206
          %1208 = vdwg.mxu0
          %1209 = vmatpush.bf16.xpose.msra.mxu0 %v931
          %1210 = vmatpush.bf16.xpose.msra.mxu0 %v923
          %1211 = vmatpush.bf16.xpose.msra.mxu0 %v915
          %1212 = vmatpush.bf16.xpose.msra.mxu0 %v907
          %1213 = vmatpush.bf16.xpose.msra.mxu0 %v899
          %1214 = vmatpush.bf16.xpose.msra.mxu0 %v891
          %1215 = vmatpush.bf16.xpose.msra.mxu0 %v883
          %1216 = vmatpush.bf16.xpose.msra.mxu0 %v875
          %1217 = vmatmul.bf16.gmra.mxu0 %v355
          %v1218 = vpop.f32.mrf.mxu0
          %v1219 = vadd.f32 %v1205, %v1218
          %v1220 = vpop.f32.mrf.mxu0
          %v1221 = vadd.f32 %v1207, %v1220
          %1222 = vdwg.mxu0
          %1223 = vmatpush.bf16.xpose.msra.mxu0 %v932
          %1224 = vmatpush.bf16.xpose.msra.mxu0 %v924
          %1225 = vmatpush.bf16.xpose.msra.mxu0 %v916
          %1226 = vmatpush.bf16.xpose.msra.mxu0 %v908
          %1227 = vmatpush.bf16.xpose.msra.mxu0 %v900
          %1228 = vmatpush.bf16.xpose.msra.mxu0 %v892
          %1229 = vmatpush.bf16.xpose.msra.mxu0 %v884
          %1230 = vmatpush.bf16.xpose.msra.mxu0 %v876
          %1231 = vmatmul.bf16.gmra.mxu0 %v356
          %v1232 = vpop.f32.mrf.mxu0
          %v1233 = vadd.f32 %v1219, %v1232
          %v1234 = vpop.f32.mrf.mxu0
          %v1235 = vadd.f32 %v1221, %v1234
          %1236 = vdwg.mxu0
          %1237 = vmatpush.bf16.xpose.msra.mxu0 %v989
          %1238 = vmatpush.bf16.xpose.msra.mxu0 %v981
          %1239 = vmatpush.bf16.xpose.msra.mxu0 %v973
          %1240 = vmatpush.bf16.xpose.msra.mxu0 %v965
          %1241 = vmatpush.bf16.xpose.msra.mxu0 %v957
          %1242 = vmatpush.bf16.xpose.msra.mxu0 %v949
          %1243 = vmatpush.bf16.xpose.msra.mxu0 %v941
          %1244 = vmatpush.bf16.xpose.msra.mxu0 %v933
          %1245 = vmatmul.bf16.gmra.mxu0 %v349
          %v1246 = vpop.f32.mrf.mxu0
          %v1247 = vadd.f32 0.0, %v1246
          %v1248 = vpop.f32.mrf.mxu0
          %v1249 = vadd.f32 0.0, %v1248
          %1250 = vdwg.mxu0
          %1251 = vmatpush.bf16.xpose.msra.mxu0 %v990
          %1252 = vmatpush.bf16.xpose.msra.mxu0 %v982
          %1253 = vmatpush.bf16.xpose.msra.mxu0 %v974
          %1254 = vmatpush.bf16.xpose.msra.mxu0 %v966
          %1255 = vmatpush.bf16.xpose.msra.mxu0 %v958
          %1256 = vmatpush.bf16.xpose.msra.mxu0 %v950
          %1257 = vmatpush.bf16.xpose.msra.mxu0 %v942
          %1258 = vmatpush.bf16.xpose.msra.mxu0 %v934
          %1259 = vmatmul.bf16.gmra.mxu0 %v350
          %v1260 = vpop.f32.mrf.mxu0
          %v1261 = vadd.f32 %v1247, %v1260
          %v1262 = vpop.f32.mrf.mxu0
          %v1263 = vadd.f32 %v1249, %v1262
          %1264 = vdwg.mxu0
          %1265 = vmatpush.bf16.xpose.msra.mxu0 %v991
          %1266 = vmatpush.bf16.xpose.msra.mxu0 %v983
          %1267 = vmatpush.bf16.xpose.msra.mxu0 %v975
          %1268 = vmatpush.bf16.xpose.msra.mxu0 %v967
          %1269 = vmatpush.bf16.xpose.msra.mxu0 %v959
          %1270 = vmatpush.bf16.xpose.msra.mxu0 %v951
          %1271 = vmatpush.bf16.xpose.msra.mxu0 %v943
          %1272 = vmatpush.bf16.xpose.msra.mxu0 %v935
          %1273 = vmatmul.bf16.gmra.mxu0 %v351
          %v1274 = vpop.f32.mrf.mxu0
          %v1275 = vadd.f32 %v1261, %v1274
          %v1276 = vpop.f32.mrf.mxu0
          %v1277 = vadd.f32 %v1263, %v1276
          %1278 = vdwg.mxu0
          %1279 = vmatpush.bf16.xpose.msra.mxu0 %v992
          %1280 = vmatpush.bf16.xpose.msra.mxu0 %v984
          %1281 = vmatpush.bf16.xpose.msra.mxu0 %v976
          %1282 = vmatpush.bf16.xpose.msra.mxu0 %v968
          %1283 = vmatpush.bf16.xpose.msra.mxu0 %v960
          %1284 = vmatpush.bf16.xpose.msra.mxu0 %v952
          %1285 = vmatpush.bf16.xpose.msra.mxu0 %v944
          %1286 = vmatpush.bf16.xpose.msra.mxu0 %v936
          %1287 = vmatmul.bf16.gmra.mxu0 %v352
          %v1288 = vpop.f32.mrf.mxu0
          %v1289 = vadd.f32 %v1275, %v1288
          %v1290 = vpop.f32.mrf.mxu0
          %v1291 = vadd.f32 %v1277, %v1290
          %1292 = vdwg.mxu0
          %1293 = vmatpush.bf16.xpose.msra.mxu0 %v993
          %1294 = vmatpush.bf16.xpose.msra.mxu0 %v985
          %1295 = vmatpush.bf16.xpose.msra.mxu0 %v977
          %1296 = vmatpush.bf16.xpose.msra.mxu0 %v969
          %1297 = vmatpush.bf16.xpose.msra.mxu0 %v961
          %1298 = vmatpush.bf16.xpose.msra.mxu0 %v953
          %1299 = vmatpush.bf16.xpose.msra.mxu0 %v945
          %1300 = vmatpush.bf16.xpose.msra.mxu0 %v937
          %1301 = vmatmul.bf16.gmra.mxu0 %v353
          %v1302 = vpop.f32.mrf.mxu0
          %v1303 = vadd.f32 %v1289, %v1302
          %v1304 = vpop.f32.mrf.mxu0
          %v1305 = vadd.f32 %v1291, %v1304
          %1306 = vdwg.mxu0
          %1307 = vmatpush.bf16.xpose.msra.mxu0 %v994
          %1308 = vmatpush.bf16.xpose.msra.mxu0 %v986
          %1309 = vmatpush.bf16.xpose.msra.mxu0 %v978
          %1310 = vmatpush.bf16.xpose.msra.mxu0 %v970
          %1311 = vmatpush.bf16.xpose.msra.mxu0 %v962
          %1312 = vmatpush.bf16.xpose.msra.mxu0 %v954
          %1313 = vmatpush.bf16.xpose.msra.mxu0 %v946
          %1314 = vmatpush.bf16.xpose.msra.mxu0 %v938
          %1315 = vmatmul.bf16.gmra.mxu0 %v354
          %v1316 = vpop.f32.mrf.mxu0
          %v1317 = vadd.f32 %v1303, %v1316
          %v1318 = vpop.f32.mrf.mxu0
          %v1319 = vadd.f32 %v1305, %v1318
          %1320 = vdwg.mxu0
          %1321 = vmatpush.bf16.xpose.msra.mxu0 %v995
          %1322 = vmatpush.bf16.xpose.msra.mxu0 %v987
          %1323 = vmatpush.bf16.xpose.msra.mxu0 %v979
          %1324 = vmatpush.bf16.xpose.msra.mxu0 %v971
          %1325 = vmatpush.bf16.xpose.msra.mxu0 %v963
          %1326 = vmatpush.bf16.xpose.msra.mxu0 %v955
          %1327 = vmatpush.bf16.xpose.msra.mxu0 %v947
          %1328 = vmatpush.bf16.xpose.msra.mxu0 %v939
          %1329 = vmatmul.bf16.gmra.mxu0 %v355
          %v1330 = vpop.f32.mrf.mxu0
          %v1331 = vadd.f32 %v1317, %v1330
          %v1332 = vpop.f32.mrf.mxu0
          %v1333 = vadd.f32 %v1319, %v1332
          %1334 = vdwg.mxu0
          %1335 = vmatpush.bf16.xpose.msra.mxu0 %v996
          %1336 = vmatpush.bf16.xpose.msra.mxu0 %v988
          %1337 = vmatpush.bf16.xpose.msra.mxu0 %v980
          %1338 = vmatpush.bf16.xpose.msra.mxu0 %v972
          %1339 = vmatpush.bf16.xpose.msra.mxu0 %v964
          %1340 = vmatpush.bf16.xpose.msra.mxu0 %v956
          %1341 = vmatpush.bf16.xpose.msra.mxu0 %v948
          %1342 = vmatpush.bf16.xpose.msra.mxu0 %v940
          %1343 = vmatmul.bf16.gmra.mxu0 %v356
          %v1344 = vpop.f32.mrf.mxu0
          %v1345 = vadd.f32 %v1331, %v1344
          %v1346 = vpop.f32.mrf.mxu0
          %v1347 = vadd.f32 %v1333, %v1346
          %1348 = vdwg.mxu0
          %v1349 = vadd.f32 %v345, %v1233
          %v1350 = vadd.f32 %v346, %v1345
          %v1351 = vadd.f32 %v347, %v1235
          %v1352 = vadd.f32 %v348, %v1347
          %1353 = vst [vmem:[#allocation2] sm:$0xff] %v1349
          %1354 = vst [vmem:[#allocation2 + $0x8] sm:$0xff] %v1350
          %1355 = vst [vmem:[#allocation2 + $0x10] sm:$0xff] %v1351
          %1356 = vst [vmem:[#allocation2 + $0x18] sm:$0xff] %v1352
          %v1357 = vld [vmem:[#allocation3] sm:$0xff]
          %v1358 = vld [vmem:[#allocation3 + $0x8] sm:$0xff]
          %v1359 = vmul.f32 %v329, %v329
          %v1360 = vmul.f32 %v330, %v330
          %v1361 = vmul.f32 %v331, %v331
          %v1362 = vmul.f32 %v332, %v332
          %v1363 = vmul.f32 %v333, %v333
          %v1364 = vmul.f32 %v334, %v334
          %v1365 = vmul.f32 %v335, %v335
          %v1366 = vmul.f32 %v336, %v336
          %v1367 = vmul.f32 %v337, %v337
          %v1368 = vmul.f32 %v338, %v338
          %v1369 = vmul.f32 %v339, %v339
          %v1370 = vmul.f32 %v340, %v340
          %v1371 = vmul.f32 %v341, %v341
          %v1372 = vmul.f32 %v342, %v342
          %v1373 = vmul.f32 %v343, %v343
          %v1374 = vmul.f32 %v344, %v344
          %v1375 = vadd.f32 %v1359, %v1360
          %v1376 = vadd.f32 %v1375, %v1361
          %v1377 = vadd.f32 %v1376, %v1362
          %v1378 = vadd.f32 %v1377, %v1363
          %v1379 = vadd.f32 %v1378, %v1364
          %v1380 = vadd.f32 %v1379, %v1365
          %v1381 = vadd.f32 %v1380, %v1366
          %1382 = vadd.xlane.f32.xlu0 %v1381
          %v1383 = vpop.xlane.xlu0 %1382
          %v1384 = vadd.f32 %v1367, %v1368
          %v1385 = vadd.f32 %v1384, %v1369
          %v1386 = vadd.f32 %v1385, %v1370
          %v1387 = vadd.f32 %v1386, %v1371
          %v1388 = vadd.f32 %v1387, %v1372
          %v1389 = vadd.f32 %v1388, %v1373
          %v1390 = vadd.f32 %v1389, %v1374
          %1391 = vadd.xlane.f32.xlu0 %v1390
          %v1392 = vpop.xlane.xlu0 %1391
          %v1393 = vadd.f32 %v1357, %v1383
          %v1394 = vadd.f32 %v1358, %v1392
          %vm1395 = vcmask 7168
          %1396 = vst.msk [vmem:[#allocation3] sm:$0xff] %vm1395, %v1393
          %1397 = vst.msk [vmem:[#allocation3 + $0x8] sm:$0xff] %vm1395, %v1394
          // Predicated region
          $region41: #{encoder_and_memory_forward.1} parent=35 // pred_check
            %p1398 = pneg %p302
          $region42: #{encoder_and_memory_forward.1} parent=35 // pred_check_branch
            %1400 = sbr.rel (%p1398) target = $region44
          $region43: #{encoder_and_memory_forward.1} parent=35 // pred_region
            %v1401 = vld [vmem:[#allocation3] sm:$0xff]
            %v1402 = vld [vmem:[#allocation3 + $0x8] sm:$0xff]
            %v1403 = vmax.f32 %v1401, 1e-16
            %v1404 = vmax.f32 %v1402, 1e-16
            %v1405 = vrsqrt.pop %v1403
            %v1406 = vmul.f32 %v1405, %v1403
            %v1407 = vmul.f32 %v1406, %v1405
            %v1408 = vmul.f32 0.5, %v1407
            %v1409 = vsub.f32 1.5, %v1408
            %v1410 = vmul.f32 %v1405, %v1409
            %vm1411 = vweird.f32 %v1403
            %vm1412 = vweird.f32 %v1405
            %vm1413 = vmor %vm1411, %vm1412
            %v1414 = vsel %vm1413, %v1405, %v1410
            %v1415 = vrsqrt.pop %v1404
            %v1416 = vmul.f32 %v1415, %v1404
            %v1417 = vmul.f32 %v1416, %v1415
            %v1418 = vmul.f32 0.5, %v1417
            %v1419 = vsub.f32 1.5, %v1418
            %v1420 = vmul.f32 %v1415, %v1419
            %vm1421 = vweird.f32 %v1404
            %vm1422 = vweird.f32 %v1415
            %vm1423 = vmor %vm1421, %vm1422
            %v1424 = vsel %vm1423, %v1415, %v1420
            %v1425 = vld [vmem:[#allocation2] sm:$0xff]
            %v1426 = vld [vmem:[#allocation2 + $0x8] sm:$0xff]
            %v1427 = vld [vmem:[#allocation2 + $0x10] sm:$0xff]
            %v1428 = vld [vmem:[#allocation2 + $0x18] sm:$0xff]
            %1430 = vset.pattern.permute.xlu0 0
            %1431 = vperm.xlu0 %1430, %v1414
            %v1432 = vpop.permute.xlu0 %1431
            %1435 = vset.pattern.permute.xlu0 0
            %1436 = vperm.xlu0 %1435, %v1424
            %v1437 = vpop.permute.xlu0 %1436
            %v1439 = vmul.f32 %v1425, %v1432
            %v1440 = vmul.f32 %v1426, %v1432
            %v1441 = vmul.f32 %v1427, %v1437
            %v1442 = vmul.f32 %v1428, %v1437
            %v1443 = vld [vmem:[%s2] sm:$0x3]
            %v1445 = vperm.slane %v1443, 0
            %v1446 = vperm.slane %v1443, 1
            %v1449 = vmul.f32 %v1439, %v1445
            %v1450 = vmul.f32 %v1440, %v1446
            %v1451 = vmul.f32 %v1441, %v1445
            %v1452 = vmul.f32 %v1442, %v1446
            %v1453 = vmax.f32 %v1449, %v1450
            %1454 = vmax.xlane.f32.xlu0 %v1453
            %v1455 = vpop.xlane.xlu0 %1454
            %v1456 = vmax.f32 %v1451, %v1452
            %1457 = vmax.xlane.f32.xlu0 %v1456
            %v1458 = vpop.xlane.xlu0 %1457
            %v1459 = vsub.f32 %v1449, %v1455
            %v1460 = vsub.f32 %v1450, %v1455
            %v1461 = vsub.f32 %v1451, %v1458
            %v1462 = vsub.f32 %v1452, %v1458
            %v1463 = vmul.f32 %v1459, 1.442695
            %v1464 = vpow.pop %v1463
            %v1465 = vmul.f32 %v1460, 1.442695
            %v1466 = vpow.pop %v1465
            %v1467 = vmul.f32 %v1461, 1.442695
            %v1468 = vpow.pop %v1467
            %v1469 = vmul.f32 %v1462, 1.442695
            %v1470 = vpow.pop %v1469
            %v1471 = vadd.f32 %v1464, %v1466
            %1472 = vadd.xlane.f32.xlu0 %v1471
            %v1473 = vpop.xlane.xlu0 %1472
            %v1474 = vadd.f32 %v1468, %v1470
            %1475 = vadd.xlane.f32.xlu0 %v1474
            %v1476 = vpop.xlane.xlu0 %1475
            %v1477 = vrcp.pop %v1473
            %v1478 = vmul.f32 %v1473, %v1477
            %v1479 = vsub.f32 1.0, %v1478
            %v1480 = vmul.f32 %v1477, %v1479
            %v1481 = vadd.f32 %v1477, %v1480
            %vm1482 = vweird.f32 %v1473
            %vm1483 = vweird.f32 %v1477
            %vm1484 = vmor %vm1482, %vm1483
            %v1485 = vsel %vm1484, %v1477, %v1481
            %v1486 = vand.u32 2147483647, %v1473
            %vm1487 = vcmp.eq.f32.partialorder %v1486, 8.507059e+37
            %v1488 = vand.u32 %v1473, 2147483648
            %v1489 = vor.u32 1.1754944e-38, %v1488
            %v1490 = vsel %vm1487, %v1489, %v1485
            %v1491 = vmul.f32 %v1464, %v1490
            %v1492 = vmul.f32 %v1466, %v1490
            %v1493 = vrcp.pop %v1476
            %v1494 = vmul.f32 %v1476, %v1493
            %v1495 = vsub.f32 1.0, %v1494
            %v1496 = vmul.f32 %v1493, %v1495
            %v1497 = vadd.f32 %v1493, %v1496
            %vm1498 = vweird.f32 %v1476
            %vm1499 = vweird.f32 %v1493
            %vm1500 = vmor %vm1498, %vm1499
            %v1501 = vsel %vm1500, %v1493, %v1497
            %v1502 = vand.u32 2147483647, %v1476
            %vm1503 = vcmp.eq.f32.partialorder %v1502, 8.507059e+37
            %v1504 = vand.u32 %v1476, 2147483648
            %v1505 = vor.u32 1.1754944e-38, %v1504
            %v1506 = vsel %vm1503, %v1505, %v1501
            %v1507 = vmul.f32 %v1468, %v1506
            %v1508 = vmul.f32 %v1470, %v1506
            %v1509 = vsub.f32 %v1491, 0.00390625
            %v1510 = vsub.f32 %v1492, 0.00390625
            %v1511 = vsub.f32 %v1507, 0.00390625
            %v1512 = vsub.f32 %v1508, 0.00390625
            %v1513 = vmax.f32 %v1509, 0.0
            %v1514 = vmax.f32 %v1510, 0.0
            %v1515 = vmax.f32 %v1511, 0.0
            %v1516 = vmax.f32 %v1512, 0.0
            %v1517 = vmul.f32 %v1513, %v1491
            %v1518 = vmul.f32 %v1514, %v1492
            %v1519 = vmul.f32 %v1515, %v1507
            %v1520 = vmul.f32 %v1516, %v1508
            %v1521 = vand.u32 2147483647, %v1509
            %v1522 = vand.u32 2147483647, %v1510
            %v1523 = vand.u32 2147483647, %v1511
            %v1524 = vand.u32 2147483647, %v1512
            %v1525 = vadd.f32 %v1521, 1e-12
            %v1526 = vadd.f32 %v1522, 1e-12
            %v1527 = vadd.f32 %v1523, 1e-12
            %v1528 = vadd.f32 %v1524, 1e-12
            %v1529 = vrcp.pop %v1525
            %v1530 = vmul.f32 %v1525, %v1529
            %v1531 = vsub.f32 1.0, %v1530
            %v1532 = vmul.f32 %v1529, %v1531
            %v1533 = vadd.f32 %v1529, %v1532
            %vm1534 = vweird.f32 %v1525
            %vm1535 = vweird.f32 %v1529
            %vm1536 = vmor %vm1534, %vm1535
            %v1537 = vsel %vm1536, %v1529, %v1533
            %v1538 = vand.u32 2147483647, %v1525
            %vm1539 = vcmp.eq.f32.partialorder %v1538, 8.507059e+37
            %v1540 = vand.u32 %v1525, 2147483648
            %v1541 = vor.u32 1.1754944e-38, %v1540
            %v1542 = vsel %vm1539, %v1541, %v1537
            %v1543 = vmul.f32 %v1517, %v1542
            %v1544 = vrcp.pop %v1526
            %v1545 = vmul.f32 %v1526, %v1544
            %v1546 = vsub.f32 1.0, %v1545
            %v1547 = vmul.f32 %v1544, %v1546
            %v1548 = vadd.f32 %v1544, %v1547
            %vm1549 = vweird.f32 %v1526
            %vm1550 = vweird.f32 %v1544
            %vm1551 = vmor %vm1549, %vm1550
            %v1552 = vsel %vm1551, %v1544, %v1548
            %v1553 = vand.u32 2147483647, %v1526
            %vm1554 = vcmp.eq.f32.partialorder %v1553, 8.507059e+37
            %v1555 = vand.u32 %v1526, 2147483648
            %v1556 = vor.u32 1.1754944e-38, %v1555
            %v1557 = vsel %vm1554, %v1556, %v1552
            %v1558 = vmul.f32 %v1518, %v1557
            %v1559 = vrcp.pop %v1527
            %v1560 = vmul.f32 %v1527, %v1559
            %v1561 = vsub.f32 1.0, %v1560
            %v1562 = vmul.f32 %v1559, %v1561
            %v1563 = vadd.f32 %v1559, %v1562
            %vm1564 = vweird.f32 %v1527
            %vm1565 = vweird.f32 %v1559
            %vm1566 = vmor %vm1564, %vm1565
            %v1567 = vsel %vm1566, %v1559, %v1563
            %v1568 = vand.u32 2147483647, %v1527
            %vm1569 = vcmp.eq.f32.partialorder %v1568, 8.507059e+37
            %v1570 = vand.u32 %v1527, 2147483648
            %v1571 = vor.u32 1.1754944e-38, %v1570
            %v1572 = vsel %vm1569, %v1571, %v1567
            %v1573 = vmul.f32 %v1519, %v1572
            %v1574 = vrcp.pop %v1528
            %v1575 = vmul.f32 %v1528, %v1574
            %v1576 = vsub.f32 1.0, %v1575
            %v1577 = vmul.f32 %v1574, %v1576
            %v1578 = vadd.f32 %v1574, %v1577
            %vm1579 = vweird.f32 %v1528
            %vm1580 = vweird.f32 %v1574
            %vm1581 = vmor %vm1579, %vm1580
            %v1582 = vsel %vm1581, %v1574, %v1578
            %v1583 = vand.u32 2147483647, %v1528
            %vm1584 = vcmp.eq.f32.partialorder %v1583, 8.507059e+37
            %v1585 = vand.u32 %v1528, 2147483648
            %v1586 = vor.u32 1.1754944e-38, %v1585
            %v1587 = vsel %vm1584, %v1586, %v1582
            %v1588 = vmul.f32 %v1520, %v1587
            %v1589 = vand.u32 2147483647, %v1543
            %v1590 = vand.u32 2147483647, %v1558
            %v1591 = vand.u32 2147483647, %v1573
            %v1592 = vand.u32 2147483647, %v1588
            %v1593 = vadd.f32 %v1589, %v1590
            %1594 = vadd.xlane.f32.xlu0 %v1593
            %v1595 = vpop.xlane.xlu0 %1594
            %v1596 = vadd.f32 %v1591, %v1592
            %1597 = vadd.xlane.f32.xlu0 %v1596
            %v1598 = vpop.xlane.xlu0 %1597
            %v1599 = vmax.f32 %v1595, 1e-12
            %v1600 = vmax.f32 %v1598, 1e-12
            %v1601 = vrcp.pop %v1599
            %v1602 = vmul.f32 %v1599, %v1601
            %v1603 = vsub.f32 1.0, %v1602
            %v1604 = vmul.f32 %v1601, %v1603
            %v1605 = vadd.f32 %v1601, %v1604
            %vm1606 = vweird.f32 %v1599
            %vm1607 = vweird.f32 %v1601
            %vm1608 = vmor %vm1606, %vm1607
            %v1609 = vsel %vm1608, %v1601, %v1605
            %v1610 = vand.u32 2147483647, %v1599
            %vm1611 = vcmp.eq.f32.partialorder %v1610, 8.507059e+37
            %v1612 = vand.u32 %v1599, 2147483648
            %v1613 = vor.u32 1.1754944e-38, %v1612
            %v1614 = vsel %vm1611, %v1613, %v1609
            %v1615 = vmul.f32 %v1543, %v1614
            %v1616 = vmul.f32 %v1558, %v1614
            %v1617 = vrcp.pop %v1600
            %v1618 = vmul.f32 %v1600, %v1617
            %v1619 = vsub.f32 1.0, %v1618
            %v1620 = vmul.f32 %v1617, %v1619
            %v1621 = vadd.f32 %v1617, %v1620
            %vm1622 = vweird.f32 %v1600
            %vm1623 = vweird.f32 %v1617
            %vm1624 = vmor %vm1622, %vm1623
            %v1625 = vsel %vm1624, %v1617, %v1621
            %v1626 = vand.u32 2147483647, %v1600
            %vm1627 = vcmp.eq.f32.partialorder %v1626, 8.507059e+37
            %v1628 = vand.u32 %v1600, 2147483648
            %v1629 = vor.u32 1.1754944e-38, %v1628
            %v1630 = vsel %vm1627, %v1629, %v1625
            %v1631 = vmul.f32 %v1573, %v1630
            %v1632 = vmul.f32 %v1588, %v1630
            %1633 = vst [vmem:[#allocation5] sm:$0xff] %v1615
            %1634 = vst [vmem:[#allocation5 + $0x8] sm:$0xff] %v1616
            %1635 = vst [vmem:[#allocation5 + $0x10] sm:$0xff] %v1631
            %1636 = vst [vmem:[#allocation5 + $0x18] sm:$0xff] %v1632
            %v1637 = vpack.c.bf16 %v1616, %v1615
            %v1638 = vpack.c.bf16 %v1632, %v1631
            %1639 = vst [vmem:[#allocation4] sm:$0xff] %v1637
            %1640 = vst [vmem:[#allocation4 + $0x8] sm:$0xff] %v1638
          $region44: #{encoder_and_memory_forward.1} parent=35 // pred_fallthru
            _
        $region36: #{encoder_and_memory_forward.1} parent=31 // pred_fallthru
          _
        %p1641 = scmp.eq.s32.totalorder %s23, 1
        // Predicated region
        $region45: #{encoder_and_memory_forward.1} parent=31 // pred_check
          %p1642 = pneg %p1641
        $region46: #{encoder_and_memory_forward.1} parent=31 // pred_check_branch
          %1644 = sbr.rel (%p1642) target = $region48
        $region47: #{encoder_and_memory_forward.1} parent=31 // pred_region
          %v1645 = vld [vmem:[#allocation4] sm:$0xff]
          %v1646 = vld [vmem:[#allocation4 + $0x8] sm:$0xff]
          %v1647 = vld [vmem:[%s281] sm:$0xff]
          %v1648 = vld [vmem:[%s281 + $0x8] sm:$0xff]
          %v1649 = vld [vmem:[%s281 + $0x10] sm:$0xff]
          %v1650 = vld [vmem:[%s281 + $0x18] sm:$0xff]
          %v1651 = vld [vmem:[%s281 + $0x20] sm:$0xff]
          %v1652 = vld [vmem:[%s281 + $0x28] sm:$0xff]
          %v1653 = vld [vmem:[%s281 + $0x30] sm:$0xff]
          %v1654 = vld [vmem:[%s281 + $0x38] sm:$0xff]
          %v1655 = vld [vmem:[%s281 + $0x40] sm:$0xff]
          %v1656 = vld [vmem:[%s281 + $0x48] sm:$0xff]
          %v1657 = vld [vmem:[%s281 + $0x50] sm:$0xff]
          %v1658 = vld [vmem:[%s281 + $0x58] sm:$0xff]
          %v1659 = vld [vmem:[%s281 + $0x60] sm:$0xff]
          %v1660 = vld [vmem:[%s281 + $0x68] sm:$0xff]
          %v1661 = vld [vmem:[%s281 + $0x70] sm:$0xff]
          %v1662 = vld [vmem:[%s281 + $0x78] sm:$0xff]
          %v1663 = vld [vmem:[%s281 + $0x80] sm:$0xff]
          %v1664 = vld [vmem:[%s281 + $0x88] sm:$0xff]
          %v1665 = vld [vmem:[%s281 + $0x90] sm:$0xff]
          %v1666 = vld [vmem:[%s281 + $0x98] sm:$0xff]
          %v1667 = vld [vmem:[%s281 + $0xa0] sm:$0xff]
          %v1668 = vld [vmem:[%s281 + $0xa8] sm:$0xff]
          %v1669 = vld [vmem:[%s281 + $0xb0] sm:$0xff]
          %v1670 = vld [vmem:[%s281 + $0xb8] sm:$0xff]
          %v1671 = vld [vmem:[%s281 + $0xc0] sm:$0xff]
          %v1672 = vld [vmem:[%s281 + $0xc8] sm:$0xff]
          %v1673 = vld [vmem:[%s281 + $0xd0] sm:$0xff]
          %v1674 = vld [vmem:[%s281 + $0xd8] sm:$0xff]
          %v1675 = vld [vmem:[%s281 + $0xe0] sm:$0xff]
          %v1676 = vld [vmem:[%s281 + $0xe8] sm:$0xff]
          %v1677 = vld [vmem:[%s281 + $0xf0] sm:$0xff]
          %v1678 = vld [vmem:[%s281 + $0xf8] sm:$0xff]
          %v1679 = vld [vmem:[%s281 + $0x100] sm:$0xff]
          %v1680 = vld [vmem:[%s281 + $0x108] sm:$0xff]
          %v1681 = vld [vmem:[%s281 + $0x110] sm:$0xff]
          %v1682 = vld [vmem:[%s281 + $0x118] sm:$0xff]
          %v1683 = vld [vmem:[%s281 + $0x120] sm:$0xff]
          %v1684 = vld [vmem:[%s281 + $0x128] sm:$0xff]
          %v1685 = vld [vmem:[%s281 + $0x130] sm:$0xff]
          %v1686 = vld [vmem:[%s281 + $0x138] sm:$0xff]
          %v1687 = vld [vmem:[%s281 + $0x140] sm:$0xff]
          %v1688 = vld [vmem:[%s281 + $0x148] sm:$0xff]
          %v1689 = vld [vmem:[%s281 + $0x150] sm:$0xff]
          %v1690 = vld [vmem:[%s281 + $0x158] sm:$0xff]
          %v1691 = vld [vmem:[%s281 + $0x160] sm:$0xff]
          %v1692 = vld [vmem:[%s281 + $0x168] sm:$0xff]
          %v1693 = vld [vmem:[%s281 + $0x170] sm:$0xff]
          %v1694 = vld [vmem:[%s281 + $0x178] sm:$0xff]
          %v1695 = vld [vmem:[%s281 + $0x180] sm:$0xff]
          %v1696 = vld [vmem:[%s281 + $0x188] sm:$0xff]
          %v1697 = vld [vmem:[%s281 + $0x190] sm:$0xff]
          %v1698 = vld [vmem:[%s281 + $0x198] sm:$0xff]
          %v1699 = vld [vmem:[%s281 + $0x1a0] sm:$0xff]
          %v1700 = vld [vmem:[%s281 + $0x1a8] sm:$0xff]
          %v1701 = vld [vmem:[%s281 + $0x1b0] sm:$0xff]
          %v1702 = vld [vmem:[%s281 + $0x1b8] sm:$0xff]
          %v1703 = vld [vmem:[%s281 + $0x1c0] sm:$0xff]
          %v1704 = vld [vmem:[%s281 + $0x1c8] sm:$0xff]
          %v1705 = vld [vmem:[%s281 + $0x1d0] sm:$0xff]
          %v1706 = vld [vmem:[%s281 + $0x1d8] sm:$0xff]
          %v1707 = vld [vmem:[%s281 + $0x1e0] sm:$0xff]
          %v1708 = vld [vmem:[%s281 + $0x1e8] sm:$0xff]
          %v1709 = vld [vmem:[%s281 + $0x1f0] sm:$0xff]
          %v1710 = vld [vmem:[%s281 + $0x1f8] sm:$0xff]
          %v1711 = vld [vmem:[%s281 + $0x200] sm:$0xff]
          %v1712 = vld [vmem:[%s281 + $0x208] sm:$0xff]
          %v1713 = vld [vmem:[%s281 + $0x210] sm:$0xff]
          %v1714 = vld [vmem:[%s281 + $0x218] sm:$0xff]
          %v1715 = vld [vmem:[%s281 + $0x220] sm:$0xff]
          %v1716 = vld [vmem:[%s281 + $0x228] sm:$0xff]
          %v1717 = vld [vmem:[%s281 + $0x230] sm:$0xff]
          %v1718 = vld [vmem:[%s281 + $0x238] sm:$0xff]
          %v1719 = vld [vmem:[%s281 + $0x240] sm:$0xff]
          %v1720 = vld [vmem:[%s281 + $0x248] sm:$0xff]
          %v1721 = vld [vmem:[%s281 + $0x250] sm:$0xff]
          %v1722 = vld [vmem:[%s281 + $0x258] sm:$0xff]
          %v1723 = vld [vmem:[%s281 + $0x260] sm:$0xff]
          %v1724 = vld [vmem:[%s281 + $0x268] sm:$0xff]
          %v1725 = vld [vmem:[%s281 + $0x270] sm:$0xff]
          %v1726 = vld [vmem:[%s281 + $0x278] sm:$0xff]
          %v1727 = vld [vmem:[%s281 + $0x280] sm:$0xff]
          %v1728 = vld [vmem:[%s281 + $0x288] sm:$0xff]
          %v1729 = vld [vmem:[%s281 + $0x290] sm:$0xff]
          %v1730 = vld [vmem:[%s281 + $0x298] sm:$0xff]
          %v1731 = vld [vmem:[%s281 + $0x2a0] sm:$0xff]
          %v1732 = vld [vmem:[%s281 + $0x2a8] sm:$0xff]
          %v1733 = vld [vmem:[%s281 + $0x2b0] sm:$0xff]
          %v1734 = vld [vmem:[%s281 + $0x2b8] sm:$0xff]
          %v1735 = vld [vmem:[%s281 + $0x2c0] sm:$0xff]
          %v1736 = vld [vmem:[%s281 + $0x2c8] sm:$0xff]
          %v1737 = vld [vmem:[%s281 + $0x2d0] sm:$0xff]
          %v1738 = vld [vmem:[%s281 + $0x2d8] sm:$0xff]
          %v1739 = vld [vmem:[%s281 + $0x2e0] sm:$0xff]
          %v1740 = vld [vmem:[%s281 + $0x2e8] sm:$0xff]
          %v1741 = vld [vmem:[%s281 + $0x2f0] sm:$0xff]
          %v1742 = vld [vmem:[%s281 + $0x2f8] sm:$0xff]
          %v1743 = vld [vmem:[%s281 + $0x300] sm:$0xff]
          %v1744 = vld [vmem:[%s281 + $0x308] sm:$0xff]
          %v1745 = vld [vmem:[%s281 + $0x310] sm:$0xff]
          %v1746 = vld [vmem:[%s281 + $0x318] sm:$0xff]
          %v1747 = vld [vmem:[%s281 + $0x320] sm:$0xff]
          %v1748 = vld [vmem:[%s281 + $0x328] sm:$0xff]
          %v1749 = vld [vmem:[%s281 + $0x330] sm:$0xff]
          %v1750 = vld [vmem:[%s281 + $0x338] sm:$0xff]
          %v1751 = vld [vmem:[%s281 + $0x340] sm:$0xff]
          %v1752 = vld [vmem:[%s281 + $0x348] sm:$0xff]
          %v1753 = vld [vmem:[%s281 + $0x350] sm:$0xff]
          %v1754 = vld [vmem:[%s281 + $0x358] sm:$0xff]
          %v1755 = vld [vmem:[%s281 + $0x360] sm:$0xff]
          %v1756 = vld [vmem:[%s281 + $0x368] sm:$0xff]
          %v1757 = vld [vmem:[%s281 + $0x370] sm:$0xff]
          %v1758 = vld [vmem:[%s281 + $0x378] sm:$0xff]
          %v1759 = vld [vmem:[%s281 + $0x380] sm:$0xff]
          %v1760 = vld [vmem:[%s281 + $0x388] sm:$0xff]
          %v1761 = vld [vmem:[%s281 + $0x390] sm:$0xff]
          %v1762 = vld [vmem:[%s281 + $0x398] sm:$0xff]
          %v1763 = vld [vmem:[%s281 + $0x3a0] sm:$0xff]
          %v1764 = vld [vmem:[%s281 + $0x3a8] sm:$0xff]
          %v1765 = vld [vmem:[%s281 + $0x3b0] sm:$0xff]
          %v1766 = vld [vmem:[%s281 + $0x3b8] sm:$0xff]
          %v1767 = vld [vmem:[%s281 + $0x3c0] sm:$0xff]
          %v1768 = vld [vmem:[%s281 + $0x3c8] sm:$0xff]
          %v1769 = vld [vmem:[%s281 + $0x3d0] sm:$0xff]
          %v1770 = vld [vmem:[%s281 + $0x3d8] sm:$0xff]
          %v1771 = vld [vmem:[%s281 + $0x3e0] sm:$0xff]
          %v1772 = vld [vmem:[%s281 + $0x3e8] sm:$0xff]
          %v1773 = vld [vmem:[%s281 + $0x3f0] sm:$0xff]
          %v1774 = vld [vmem:[%s281 + $0x3f8] sm:$0xff]
          %v1777 = vunpack.c.l.b16 %v1645
          %v1778 = vunpack.c.h.b16 %v1645
          %v1779 = vunpack.c.l.b16 %v1646
          %v1780 = vunpack.c.h.b16 %v1646
          %v1781 = vpack.c.b16 %v1779, %v1777
          %v1782 = vpack.c.b16 %v1780, %v1778
          %v1913 = vunpack.c.l.b16 %v1647
          %v1914 = vunpack.c.h.b16 %v1647
          %v1915 = vunpack.c.l.b16 %v1648
          %v1916 = vunpack.c.h.b16 %v1648
          %v1917 = vunpack.c.l.b16 %v1649
          %v1918 = vunpack.c.h.b16 %v1649
          %v1919 = vunpack.c.l.b16 %v1650
          %v1920 = vunpack.c.h.b16 %v1650
          %v1921 = vunpack.c.l.b16 %v1651
          %v1922 = vunpack.c.h.b16 %v1651
          %v1923 = vunpack.c.l.b16 %v1652
          %v1924 = vunpack.c.h.b16 %v1652
          %v1925 = vunpack.c.l.b16 %v1653
          %v1926 = vunpack.c.h.b16 %v1653
          %v1927 = vunpack.c.l.b16 %v1654
          %v1928 = vunpack.c.h.b16 %v1654
          %v1929 = vunpack.c.l.b16 %v1655
          %v1930 = vunpack.c.h.b16 %v1655
          %v1931 = vunpack.c.l.b16 %v1656
          %v1932 = vunpack.c.h.b16 %v1656
          %v1933 = vunpack.c.l.b16 %v1657
          %v1934 = vunpack.c.h.b16 %v1657
          %v1935 = vunpack.c.l.b16 %v1658
          %v1936 = vunpack.c.h.b16 %v1658
          %v1937 = vunpack.c.l.b16 %v1659
          %v1938 = vunpack.c.h.b16 %v1659
          %v1939 = vunpack.c.l.b16 %v1660
          %v1940 = vunpack.c.h.b16 %v1660
          %v1941 = vunpack.c.l.b16 %v1661
          %v1942 = vunpack.c.h.b16 %v1661
          %v1943 = vunpack.c.l.b16 %v1662
          %v1944 = vunpack.c.h.b16 %v1662
          %v1945 = vunpack.c.l.b16 %v1663
          %v1946 = vunpack.c.h.b16 %v1663
          %v1947 = vunpack.c.l.b16 %v1664
          %v1948 = vunpack.c.h.b16 %v1664
          %v1949 = vunpack.c.l.b16 %v1665
          %v1950 = vunpack.c.h.b16 %v1665
          %v1951 = vunpack.c.l.b16 %v1666
          %v1952 = vunpack.c.h.b16 %v1666
          %v1953 = vunpack.c.l.b16 %v1667
          %v1954 = vunpack.c.h.b16 %v1667
          %v1955 = vunpack.c.l.b16 %v1668
          %v1956 = vunpack.c.h.b16 %v1668
          %v1957 = vunpack.c.l.b16 %v1669
          %v1958 = vunpack.c.h.b16 %v1669
          %v1959 = vunpack.c.l.b16 %v1670
          %v1960 = vunpack.c.h.b16 %v1670
          %v1961 = vunpack.c.l.b16 %v1671
          %v1962 = vunpack.c.h.b16 %v1671
          %v1963 = vunpack.c.l.b16 %v1672
          %v1964 = vunpack.c.h.b16 %v1672
          %v1965 = vunpack.c.l.b16 %v1673
          %v1966 = vunpack.c.h.b16 %v1673
          %v1967 = vunpack.c.l.b16 %v1674
          %v1968 = vunpack.c.h.b16 %v1674
          %v1969 = vunpack.c.l.b16 %v1675
          %v1970 = vunpack.c.h.b16 %v1675
          %v1971 = vunpack.c.l.b16 %v1676
          %v1972 = vunpack.c.h.b16 %v1676
          %v1973 = vunpack.c.l.b16 %v1677
          %v1974 = vunpack.c.h.b16 %v1677
          %v1975 = vunpack.c.l.b16 %v1678
          %v1976 = vunpack.c.h.b16 %v1678
          %v1977 = vunpack.c.l.b16 %v1679
          %v1978 = vunpack.c.h.b16 %v1679
          %v1979 = vunpack.c.l.b16 %v1680
          %v1980 = vunpack.c.h.b16 %v1680
          %v1981 = vunpack.c.l.b16 %v1681
          %v1982 = vunpack.c.h.b16 %v1681
          %v1983 = vunpack.c.l.b16 %v1682
          %v1984 = vunpack.c.h.b16 %v1682
          %v1985 = vunpack.c.l.b16 %v1683
          %v1986 = vunpack.c.h.b16 %v1683
          %v1987 = vunpack.c.l.b16 %v1684
          %v1988 = vunpack.c.h.b16 %v1684
          %v1989 = vunpack.c.l.b16 %v1685
          %v1990 = vunpack.c.h.b16 %v1685
          %v1991 = vunpack.c.l.b16 %v1686
          %v1992 = vunpack.c.h.b16 %v1686
          %v1993 = vunpack.c.l.b16 %v1687
          %v1994 = vunpack.c.h.b16 %v1687
          %v1995 = vunpack.c.l.b16 %v1688
          %v1996 = vunpack.c.h.b16 %v1688
          %v1997 = vunpack.c.l.b16 %v1689
          %v1998 = vunpack.c.h.b16 %v1689
          %v1999 = vunpack.c.l.b16 %v1690
          %v2000 = vunpack.c.h.b16 %v1690
          %v2001 = vunpack.c.l.b16 %v1691
          %v2002 = vunpack.c.h.b16 %v1691
          %v2003 = vunpack.c.l.b16 %v1692
          %v2004 = vunpack.c.h.b16 %v1692
          %v2005 = vunpack.c.l.b16 %v1693
          %v2006 = vunpack.c.h.b16 %v1693
          %v2007 = vunpack.c.l.b16 %v1694
          %v2008 = vunpack.c.h.b16 %v1694
          %v2009 = vunpack.c.l.b16 %v1695
          %v2010 = vunpack.c.h.b16 %v1695
          %v2011 = vunpack.c.l.b16 %v1696
          %v2012 = vunpack.c.h.b16 %v1696
          %v2013 = vunpack.c.l.b16 %v1697
          %v2014 = vunpack.c.h.b16 %v1697
          %v2015 = vunpack.c.l.b16 %v1698
          %v2016 = vunpack.c.h.b16 %v1698
          %v2017 = vunpack.c.l.b16 %v1699
          %v2018 = vunpack.c.h.b16 %v1699
          %v2019 = vunpack.c.l.b16 %v1700
          %v2020 = vunpack.c.h.b16 %v1700
          %v2021 = vunpack.c.l.b16 %v1701
          %v2022 = vunpack.c.h.b16 %v1701
          %v2023 = vunpack.c.l.b16 %v1702
          %v2024 = vunpack.c.h.b16 %v1702
          %v2025 = vunpack.c.l.b16 %v1703
          %v2026 = vunpack.c.h.b16 %v1703
          %v2027 = vunpack.c.l.b16 %v1704
          %v2028 = vunpack.c.h.b16 %v1704
          %v2029 = vunpack.c.l.b16 %v1705
          %v2030 = vunpack.c.h.b16 %v1705
          %v2031 = vunpack.c.l.b16 %v1706
          %v2032 = vunpack.c.h.b16 %v1706
          %v2033 = vunpack.c.l.b16 %v1707
          %v2034 = vunpack.c.h.b16 %v1707
          %v2035 = vunpack.c.l.b16 %v1708
          %v2036 = vunpack.c.h.b16 %v1708
          %v2037 = vunpack.c.l.b16 %v1709
          %v2038 = vunpack.c.h.b16 %v1709
          %v2039 = vunpack.c.l.b16 %v1710
          %v2040 = vunpack.c.h.b16 %v1710
          %v2041 = vunpack.c.l.b16 %v1711
          %v2042 = vunpack.c.h.b16 %v1711
          %v2043 = vunpack.c.l.b16 %v1712
          %v2044 = vunpack.c.h.b16 %v1712
          %v2045 = vunpack.c.l.b16 %v1713
          %v2046 = vunpack.c.h.b16 %v1713
          %v2047 = vunpack.c.l.b16 %v1714
          %v2048 = vunpack.c.h.b16 %v1714
          %v2049 = vunpack.c.l.b16 %v1715
          %v2050 = vunpack.c.h.b16 %v1715
          %v2051 = vunpack.c.l.b16 %v1716
          %v2052 = vunpack.c.h.b16 %v1716
          %v2053 = vunpack.c.l.b16 %v1717
          %v2054 = vunpack.c.h.b16 %v1717
          %v2055 = vunpack.c.l.b16 %v1718
          %v2056 = vunpack.c.h.b16 %v1718
          %v2057 = vunpack.c.l.b16 %v1719
          %v2058 = vunpack.c.h.b16 %v1719
          %v2059 = vunpack.c.l.b16 %v1720
          %v2060 = vunpack.c.h.b16 %v1720
          %v2061 = vunpack.c.l.b16 %v1721
          %v2062 = vunpack.c.h.b16 %v1721
          %v2063 = vunpack.c.l.b16 %v1722
          %v2064 = vunpack.c.h.b16 %v1722
          %v2065 = vunpack.c.l.b16 %v1723
          %v2066 = vunpack.c.h.b16 %v1723
          %v2067 = vunpack.c.l.b16 %v1724
          %v2068 = vunpack.c.h.b16 %v1724
          %v2069 = vunpack.c.l.b16 %v1725
          %v2070 = vunpack.c.h.b16 %v1725
          %v2071 = vunpack.c.l.b16 %v1726
          %v2072 = vunpack.c.h.b16 %v1726
          %v2073 = vunpack.c.l.b16 %v1727
          %v2074 = vunpack.c.h.b16 %v1727
          %v2075 = vunpack.c.l.b16 %v1728
          %v2076 = vunpack.c.h.b16 %v1728
          %v2077 = vunpack.c.l.b16 %v1729
          %v2078 = vunpack.c.h.b16 %v1729
          %v2079 = vunpack.c.l.b16 %v1730
          %v2080 = vunpack.c.h.b16 %v1730
          %v2081 = vunpack.c.l.b16 %v1731
          %v2082 = vunpack.c.h.b16 %v1731
          %v2083 = vunpack.c.l.b16 %v1732
          %v2084 = vunpack.c.h.b16 %v1732
          %v2085 = vunpack.c.l.b16 %v1733
          %v2086 = vunpack.c.h.b16 %v1733
          %v2087 = vunpack.c.l.b16 %v1734
          %v2088 = vunpack.c.h.b16 %v1734
          %v2089 = vunpack.c.l.b16 %v1735
          %v2090 = vunpack.c.h.b16 %v1735
          %v2091 = vunpack.c.l.b16 %v1736
          %v2092 = vunpack.c.h.b16 %v1736
          %v2093 = vunpack.c.l.b16 %v1737
          %v2094 = vunpack.c.h.b16 %v1737
          %v2095 = vunpack.c.l.b16 %v1738
          %v2096 = vunpack.c.h.b16 %v1738
          %v2097 = vunpack.c.l.b16 %v1739
          %v2098 = vunpack.c.h.b16 %v1739
          %v2099 = vunpack.c.l.b16 %v1740
          %v2100 = vunpack.c.h.b16 %v1740
          %v2101 = vunpack.c.l.b16 %v1741
          %v2102 = vunpack.c.h.b16 %v1741
          %v2103 = vunpack.c.l.b16 %v1742
          %v2104 = vunpack.c.h.b16 %v1742
          %v2105 = vunpack.c.l.b16 %v1743
          %v2106 = vunpack.c.h.b16 %v1743
          %v2107 = vunpack.c.l.b16 %v1744
          %v2108 = vunpack.c.h.b16 %v1744
          %v2109 = vunpack.c.l.b16 %v1745
          %v2110 = vunpack.c.h.b16 %v1745
          %v2111 = vunpack.c.l.b16 %v1746
          %v2112 = vunpack.c.h.b16 %v1746
          %v2113 = vunpack.c.l.b16 %v1747
          %v2114 = vunpack.c.h.b16 %v1747
          %v2115 = vunpack.c.l.b16 %v1748
          %v2116 = vunpack.c.h.b16 %v1748
          %v2117 = vunpack.c.l.b16 %v1749
          %v2118 = vunpack.c.h.b16 %v1749
          %v2119 = vunpack.c.l.b16 %v1750
          %v2120 = vunpack.c.h.b16 %v1750
          %v2121 = vunpack.c.l.b16 %v1751
          %v2122 = vunpack.c.h.b16 %v1751
          %v2123 = vunpack.c.l.b16 %v1752
          %v2124 = vunpack.c.h.b16 %v1752
          %v2125 = vunpack.c.l.b16 %v1753
          %v2126 = vunpack.c.h.b16 %v1753
          %v2127 = vunpack.c.l.b16 %v1754
          %v2128 = vunpack.c.h.b16 %v1754
          %v2129 = vunpack.c.l.b16 %v1755
          %v2130 = vunpack.c.h.b16 %v1755
          %v2131 = vunpack.c.l.b16 %v1756
          %v2132 = vunpack.c.h.b16 %v1756
          %v2133 = vunpack.c.l.b16 %v1757
          %v2134 = vunpack.c.h.b16 %v1757
          %v2135 = vunpack.c.l.b16 %v1758
          %v2136 = vunpack.c.h.b16 %v1758
          %v2137 = vunpack.c.l.b16 %v1759
          %v2138 = vunpack.c.h.b16 %v1759
          %v2139 = vunpack.c.l.b16 %v1760
          %v2140 = vunpack.c.h.b16 %v1760
          %v2141 = vunpack.c.l.b16 %v1761
          %v2142 = vunpack.c.h.b16 %v1761
          %v2143 = vunpack.c.l.b16 %v1762
          %v2144 = vunpack.c.h.b16 %v1762
          %v2145 = vunpack.c.l.b16 %v1763
          %v2146 = vunpack.c.h.b16 %v1763
          %v2147 = vunpack.c.l.b16 %v1764
          %v2148 = vunpack.c.h.b16 %v1764
          %v2149 = vunpack.c.l.b16 %v1765
          %v2150 = vunpack.c.h.b16 %v1765
          %v2151 = vunpack.c.l.b16 %v1766
          %v2152 = vunpack.c.h.b16 %v1766
          %v2153 = vunpack.c.l.b16 %v1767
          %v2154 = vunpack.c.h.b16 %v1767
          %v2155 = vunpack.c.l.b16 %v1768
          %v2156 = vunpack.c.h.b16 %v1768
          %v2157 = vunpack.c.l.b16 %v1769
          %v2158 = vunpack.c.h.b16 %v1769
          %v2159 = vunpack.c.l.b16 %v1770
          %v2160 = vunpack.c.h.b16 %v1770
          %v2161 = vunpack.c.l.b16 %v1771
          %v2162 = vunpack.c.h.b16 %v1771
          %v2163 = vunpack.c.l.b16 %v1772
          %v2164 = vunpack.c.h.b16 %v1772
          %v2165 = vunpack.c.l.b16 %v1773
          %v2166 = vunpack.c.h.b16 %v1773
          %v2167 = vunpack.c.l.b16 %v1774
          %v2168 = vunpack.c.h.b16 %v1774
          %v2169 = vpack.c.b16 %v1921, %v1913
          %v2170 = vpack.c.b16 %v1922, %v1914
          %v2171 = vpack.c.b16 %v1923, %v1915
          %v2172 = vpack.c.b16 %v1924, %v1916
          %v2173 = vpack.c.b16 %v1925, %v1917
          %v2174 = vpack.c.b16 %v1926, %v1918
          %v2175 = vpack.c.b16 %v1927, %v1919
          %v2176 = vpack.c.b16 %v1928, %v1920
          %v2177 = vpack.c.b16 %v1937, %v1929
          %v2178 = vpack.c.b16 %v1938, %v1930
          %v2179 = vpack.c.b16 %v1939, %v1931
          %v2180 = vpack.c.b16 %v1940, %v1932
          %v2181 = vpack.c.b16 %v1941, %v1933
          %v2182 = vpack.c.b16 %v1942, %v1934
          %v2183 = vpack.c.b16 %v1943, %v1935
          %v2184 = vpack.c.b16 %v1944, %v1936
          %v2185 = vpack.c.b16 %v1953, %v1945
          %v2186 = vpack.c.b16 %v1954, %v1946
          %v2187 = vpack.c.b16 %v1955, %v1947
          %v2188 = vpack.c.b16 %v1956, %v1948
          %v2189 = vpack.c.b16 %v1957, %v1949
          %v2190 = vpack.c.b16 %v1958, %v1950
          %v2191 = vpack.c.b16 %v1959, %v1951
          %v2192 = vpack.c.b16 %v1960, %v1952
          %v2193 = vpack.c.b16 %v1969, %v1961
          %v2194 = vpack.c.b16 %v1970, %v1962
          %v2195 = vpack.c.b16 %v1971, %v1963
          %v2196 = vpack.c.b16 %v1972, %v1964
          %v2197 = vpack.c.b16 %v1973, %v1965
          %v2198 = vpack.c.b16 %v1974, %v1966
          %v2199 = vpack.c.b16 %v1975, %v1967
          %v2200 = vpack.c.b16 %v1976, %v1968
          %v2201 = vpack.c.b16 %v1985, %v1977
          %v2202 = vpack.c.b16 %v1986, %v1978
          %v2203 = vpack.c.b16 %v1987, %v1979
          %v2204 = vpack.c.b16 %v1988, %v1980
          %v2205 = vpack.c.b16 %v1989, %v1981
          %v2206 = vpack.c.b16 %v1990, %v1982
          %v2207 = vpack.c.b16 %v1991, %v1983
          %v2208 = vpack.c.b16 %v1992, %v1984
          %v2209 = vpack.c.b16 %v2001, %v1993
          %v2210 = vpack.c.b16 %v2002, %v1994
          %v2211 = vpack.c.b16 %v2003, %v1995
          %v2212 = vpack.c.b16 %v2004, %v1996
          %v2213 = vpack.c.b16 %v2005, %v1997
          %v2214 = vpack.c.b16 %v2006, %v1998
          %v2215 = vpack.c.b16 %v2007, %v1999
          %v2216 = vpack.c.b16 %v2008, %v2000
          %v2217 = vpack.c.b16 %v2017, %v2009
          %v2218 = vpack.c.b16 %v2018, %v2010
          %v2219 = vpack.c.b16 %v2019, %v2011
          %v2220 = vpack.c.b16 %v2020, %v2012
          %v2221 = vpack.c.b16 %v2021, %v2013
          %v2222 = vpack.c.b16 %v2022, %v2014
          %v2223 = vpack.c.b16 %v2023, %v2015
          %v2224 = vpack.c.b16 %v2024, %v2016
          %v2225 = vpack.c.b16 %v2033, %v2025
          %v2226 = vpack.c.b16 %v2034, %v2026
          %v2227 = vpack.c.b16 %v2035, %v2027
          %v2228 = vpack.c.b16 %v2036, %v2028
          %v2229 = vpack.c.b16 %v2037, %v2029
          %v2230 = vpack.c.b16 %v2038, %v2030
          %v2231 = vpack.c.b16 %v2039, %v2031
          %v2232 = vpack.c.b16 %v2040, %v2032
          %v2233 = vpack.c.b16 %v2049, %v2041
          %v2234 = vpack.c.b16 %v2050, %v2042
          %v2235 = vpack.c.b16 %v2051, %v2043
          %v2236 = vpack.c.b16 %v2052, %v2044
          %v2237 = vpack.c.b16 %v2053, %v2045
          %v2238 = vpack.c.b16 %v2054, %v2046
          %v2239 = vpack.c.b16 %v2055, %v2047
          %v2240 = vpack.c.b16 %v2056, %v2048
          %v2241 = vpack.c.b16 %v2065, %v2057
          %v2242 = vpack.c.b16 %v2066, %v2058
          %v2243 = vpack.c.b16 %v2067, %v2059
          %v2244 = vpack.c.b16 %v2068, %v2060
          %v2245 = vpack.c.b16 %v2069, %v2061
          %v2246 = vpack.c.b16 %v2070, %v2062
          %v2247 = vpack.c.b16 %v2071, %v2063
          %v2248 = vpack.c.b16 %v2072, %v2064
          %v2249 = vpack.c.b16 %v2081, %v2073
          %v2250 = vpack.c.b16 %v2082, %v2074
          %v2251 = vpack.c.b16 %v2083, %v2075
          %v2252 = vpack.c.b16 %v2084, %v2076
          %v2253 = vpack.c.b16 %v2085, %v2077
          %v2254 = vpack.c.b16 %v2086, %v2078
          %v2255 = vpack.c.b16 %v2087, %v2079
          %v2256 = vpack.c.b16 %v2088, %v2080
          %v2257 = vpack.c.b16 %v2097, %v2089
          %v2258 = vpack.c.b16 %v2098, %v2090
          %v2259 = vpack.c.b16 %v2099, %v2091
          %v2260 = vpack.c.b16 %v2100, %v2092
          %v2261 = vpack.c.b16 %v2101, %v2093
          %v2262 = vpack.c.b16 %v2102, %v2094
          %v2263 = vpack.c.b16 %v2103, %v2095
          %v2264 = vpack.c.b16 %v2104, %v2096
          %v2265 = vpack.c.b16 %v2113, %v2105
          %v2266 = vpack.c.b16 %v2114, %v2106
          %v2267 = vpack.c.b16 %v2115, %v2107
          %v2268 = vpack.c.b16 %v2116, %v2108
          %v2269 = vpack.c.b16 %v2117, %v2109
          %v2270 = vpack.c.b16 %v2118, %v2110
          %v2271 = vpack.c.b16 %v2119, %v2111
          %v2272 = vpack.c.b16 %v2120, %v2112
          %v2273 = vpack.c.b16 %v2129, %v2121
          %v2274 = vpack.c.b16 %v2130, %v2122
          %v2275 = vpack.c.b16 %v2131, %v2123
          %v2276 = vpack.c.b16 %v2132, %v2124
          %v2277 = vpack.c.b16 %v2133, %v2125
          %v2278 = vpack.c.b16 %v2134, %v2126
          %v2279 = vpack.c.b16 %v2135, %v2127
          %v2280 = vpack.c.b16 %v2136, %v2128
          %v2281 = vpack.c.b16 %v2145, %v2137
          %v2282 = vpack.c.b16 %v2146, %v2138
          %v2283 = vpack.c.b16 %v2147, %v2139
          %v2284 = vpack.c.b16 %v2148, %v2140
          %v2285 = vpack.c.b16 %v2149, %v2141
          %v2286 = vpack.c.b16 %v2150, %v2142
          %v2287 = vpack.c.b16 %v2151, %v2143
          %v2288 = vpack.c.b16 %v2152, %v2144
          %v2289 = vpack.c.b16 %v2161, %v2153
          %v2290 = vpack.c.b16 %v2162, %v2154
          %v2291 = vpack.c.b16 %v2163, %v2155
          %v2292 = vpack.c.b16 %v2164, %v2156
          %v2293 = vpack.c.b16 %v2165, %v2157
          %v2294 = vpack.c.b16 %v2166, %v2158
          %v2295 = vpack.c.b16 %v2167, %v2159
          %v2296 = vpack.c.b16 %v2168, %v2160
          %2425 = vmatpush.bf16.msra.mxu0 %v2225
          %2426 = vmatpush.bf16.msra.mxu0 %v2217
          %2427 = vmatpush.bf16.msra.mxu0 %v2209
          %2428 = vmatpush.bf16.msra.mxu0 %v2201
          %2429 = vmatpush.bf16.msra.mxu0 %v2193
          %2430 = vmatpush.bf16.msra.mxu0 %v2185
          %2431 = vmatpush.bf16.msra.mxu0 %v2177
          %2432 = vmatpush.bf16.msra.mxu0 %v2169
          %2433 = vmatmul.bf16.gmra.mxu0 %v1781
          %v2434 = vpop.f32.mrf.mxu0
          %v2435 = vadd.f32 0.0, %v2434
          %v2436 = vpop.f32.mrf.mxu0
          %v2437 = vadd.f32 0.0, %v2436
          %2438 = vdwg.mxu0
          %2439 = vmatpush.bf16.msra.mxu0 %v2289
          %2440 = vmatpush.bf16.msra.mxu0 %v2281
          %2441 = vmatpush.bf16.msra.mxu0 %v2273
          %2442 = vmatpush.bf16.msra.mxu0 %v2265
          %2443 = vmatpush.bf16.msra.mxu0 %v2257
          %2444 = vmatpush.bf16.msra.mxu0 %v2249
          %2445 = vmatpush.bf16.msra.mxu0 %v2241
          %2446 = vmatpush.bf16.msra.mxu0 %v2233
          %2447 = vmatmul.bf16.gmra.mxu0 %v1782
          %v2448 = vpop.f32.mrf.mxu0
          %v2449 = vadd.f32 %v2435, %v2448
          %v2450 = vpop.f32.mrf.mxu0
          %v2451 = vadd.f32 %v2437, %v2450
          %2452 = vdwg.mxu0
          %2453 = vmatpush.bf16.msra.mxu0 %v2226
          %2454 = vmatpush.bf16.msra.mxu0 %v2218
          %2455 = vmatpush.bf16.msra.mxu0 %v2210
          %2456 = vmatpush.bf16.msra.mxu0 %v2202
          %2457 = vmatpush.bf16.msra.mxu0 %v2194
          %2458 = vmatpush.bf16.msra.mxu0 %v2186
          %2459 = vmatpush.bf16.msra.mxu0 %v2178
          %2460 = vmatpush.bf16.msra.mxu0 %v2170
          %2461 = vmatmul.bf16.gmra.mxu0 %v1781
          %v2462 = vpop.f32.mrf.mxu0
          %v2463 = vadd.f32 0.0, %v2462
          %v2464 = vpop.f32.mrf.mxu0
          %v2465 = vadd.f32 0.0, %v2464
          %2466 = vdwg.mxu0
          %2467 = vmatpush.bf16.msra.mxu0 %v2290
          %2468 = vmatpush.bf16.msra.mxu0 %v2282
          %2469 = vmatpush.bf16.msra.mxu0 %v2274
          %2470 = vmatpush.bf16.msra.mxu0 %v2266
          %2471 = vmatpush.bf16.msra.mxu0 %v2258
          %2472 = vmatpush.bf16.msra.mxu0 %v2250
          %2473 = vmatpush.bf16.msra.mxu0 %v2242
          %2474 = vmatpush.bf16.msra.mxu0 %v2234
          %2475 = vmatmul.bf16.gmra.mxu0 %v1782
          %v2476 = vpop.f32.mrf.mxu0
          %v2477 = vadd.f32 %v2463, %v2476
          %v2478 = vpop.f32.mrf.mxu0
          %v2479 = vadd.f32 %v2465, %v2478
          %2480 = vdwg.mxu0
          %2481 = vmatpush.bf16.msra.mxu0 %v2227
          %2482 = vmatpush.bf16.msra.mxu0 %v2219
          %2483 = vmatpush.bf16.msra.mxu0 %v2211
          %2484 = vmatpush.bf16.msra.mxu0 %v2203
          %2485 = vmatpush.bf16.msra.mxu0 %v2195
          %2486 = vmatpush.bf16.msra.mxu0 %v2187
          %2487 = vmatpush.bf16.msra.mxu0 %v2179
          %2488 = vmatpush.bf16.msra.mxu0 %v2171
          %2489 = vmatmul.bf16.gmra.mxu0 %v1781
          %v2490 = vpop.f32.mrf.mxu0
          %v2491 = vadd.f32 0.0, %v2490
          %v2492 = vpop.f32.mrf.mxu0
          %v2493 = vadd.f32 0.0, %v2492
          %2494 = vdwg.mxu0
          %2495 = vmatpush.bf16.msra.mxu0 %v2291
          %2496 = vmatpush.bf16.msra.mxu0 %v2283
          %2497 = vmatpush.bf16.msra.mxu0 %v2275
          %2498 = vmatpush.bf16.msra.mxu0 %v2267
          %2499 = vmatpush.bf16.msra.mxu0 %v2259
          %2500 = vmatpush.bf16.msra.mxu0 %v2251
          %2501 = vmatpush.bf16.msra.mxu0 %v2243
          %2502 = vmatpush.bf16.msra.mxu0 %v2235
          %2503 = vmatmul.bf16.gmra.mxu0 %v1782
          %v2504 = vpop.f32.mrf.mxu0
          %v2505 = vadd.f32 %v2491, %v2504
          %v2506 = vpop.f32.mrf.mxu0
          %v2507 = vadd.f32 %v2493, %v2506
          %2508 = vdwg.mxu0
          %2509 = vmatpush.bf16.msra.mxu0 %v2228
          %2510 = vmatpush.bf16.msra.mxu0 %v2220
          %2511 = vmatpush.bf16.msra.mxu0 %v2212
          %2512 = vmatpush.bf16.msra.mxu0 %v2204
          %2513 = vmatpush.bf16.msra.mxu0 %v2196
          %2514 = vmatpush.bf16.msra.mxu0 %v2188
          %2515 = vmatpush.bf16.msra.mxu0 %v2180
          %2516 = vmatpush.bf16.msra.mxu0 %v2172
          %2517 = vmatmul.bf16.gmra.mxu0 %v1781
          %v2518 = vpop.f32.mrf.mxu0
          %v2519 = vadd.f32 0.0, %v2518
          %v2520 = vpop.f32.mrf.mxu0
          %v2521 = vadd.f32 0.0, %v2520
          %2522 = vdwg.mxu0
          %2523 = vmatpush.bf16.msra.mxu0 %v2292
          %2524 = vmatpush.bf16.msra.mxu0 %v2284
          %2525 = vmatpush.bf16.msra.mxu0 %v2276
          %2526 = vmatpush.bf16.msra.mxu0 %v2268
          %2527 = vmatpush.bf16.msra.mxu0 %v2260
          %2528 = vmatpush.bf16.msra.mxu0 %v2252
          %2529 = vmatpush.bf16.msra.mxu0 %v2244
          %2530 = vmatpush.bf16.msra.mxu0 %v2236
          %2531 = vmatmul.bf16.gmra.mxu0 %v1782
          %v2532 = vpop.f32.mrf.mxu0
          %v2533 = vadd.f32 %v2519, %v2532
          %v2534 = vpop.f32.mrf.mxu0
          %v2535 = vadd.f32 %v2521, %v2534
          %2536 = vdwg.mxu0
          %2537 = vmatpush.bf16.msra.mxu0 %v2229
          %2538 = vmatpush.bf16.msra.mxu0 %v2221
          %2539 = vmatpush.bf16.msra.mxu0 %v2213
          %2540 = vmatpush.bf16.msra.mxu0 %v2205
          %2541 = vmatpush.bf16.msra.mxu0 %v2197
          %2542 = vmatpush.bf16.msra.mxu0 %v2189
          %2543 = vmatpush.bf16.msra.mxu0 %v2181
          %2544 = vmatpush.bf16.msra.mxu0 %v2173
          %2545 = vmatmul.bf16.gmra.mxu0 %v1781
          %v2546 = vpop.f32.mrf.mxu0
          %v2547 = vadd.f32 0.0, %v2546
          %v2548 = vpop.f32.mrf.mxu0
          %v2549 = vadd.f32 0.0, %v2548
          %2550 = vdwg.mxu0
          %2551 = vmatpush.bf16.msra.mxu0 %v2293
          %2552 = vmatpush.bf16.msra.mxu0 %v2285
          %2553 = vmatpush.bf16.msra.mxu0 %v2277
          %2554 = vmatpush.bf16.msra.mxu0 %v2269
          %2555 = vmatpush.bf16.msra.mxu0 %v2261
          %2556 = vmatpush.bf16.msra.mxu0 %v2253
          %2557 = vmatpush.bf16.msra.mxu0 %v2245
          %2558 = vmatpush.bf16.msra.mxu0 %v2237
          %2559 = vmatmul.bf16.gmra.mxu0 %v1782
          %v2560 = vpop.f32.mrf.mxu0
          %v2561 = vadd.f32 %v2547, %v2560
          %v2562 = vpop.f32.mrf.mxu0
          %v2563 = vadd.f32 %v2549, %v2562
          %2564 = vdwg.mxu0
          %2565 = vmatpush.bf16.msra.mxu0 %v2230
          %2566 = vmatpush.bf16.msra.mxu0 %v2222
          %2567 = vmatpush.bf16.msra.mxu0 %v2214
          %2568 = vmatpush.bf16.msra.mxu0 %v2206
          %2569 = vmatpush.bf16.msra.mxu0 %v2198
          %2570 = vmatpush.bf16.msra.mxu0 %v2190
          %2571 = vmatpush.bf16.msra.mxu0 %v2182
          %2572 = vmatpush.bf16.msra.mxu0 %v2174
          %2573 = vmatmul.bf16.gmra.mxu0 %v1781
          %v2574 = vpop.f32.mrf.mxu0
          %v2575 = vadd.f32 0.0, %v2574
          %v2576 = vpop.f32.mrf.mxu0
          %v2577 = vadd.f32 0.0, %v2576
          %2578 = vdwg.mxu0
          %2579 = vmatpush.bf16.msra.mxu0 %v2294
          %2580 = vmatpush.bf16.msra.mxu0 %v2286
          %2581 = vmatpush.bf16.msra.mxu0 %v2278
          %2582 = vmatpush.bf16.msra.mxu0 %v2270
          %2583 = vmatpush.bf16.msra.mxu0 %v2262
          %2584 = vmatpush.bf16.msra.mxu0 %v2254
          %2585 = vmatpush.bf16.msra.mxu0 %v2246
          %2586 = vmatpush.bf16.msra.mxu0 %v2238
          %2587 = vmatmul.bf16.gmra.mxu0 %v1782
          %v2588 = vpop.f32.mrf.mxu0
          %v2589 = vadd.f32 %v2575, %v2588
          %v2590 = vpop.f32.mrf.mxu0
          %v2591 = vadd.f32 %v2577, %v2590
          %2592 = vdwg.mxu0
          %2593 = vmatpush.bf16.msra.mxu0 %v2231
          %2594 = vmatpush.bf16.msra.mxu0 %v2223
          %2595 = vmatpush.bf16.msra.mxu0 %v2215
          %2596 = vmatpush.bf16.msra.mxu0 %v2207
          %2597 = vmatpush.bf16.msra.mxu0 %v2199
          %2598 = vmatpush.bf16.msra.mxu0 %v2191
          %2599 = vmatpush.bf16.msra.mxu0 %v2183
          %2600 = vmatpush.bf16.msra.mxu0 %v2175
          %2601 = vmatmul.bf16.gmra.mxu0 %v1781
          %v2602 = vpop.f32.mrf.mxu0
          %v2603 = vadd.f32 0.0, %v2602
          %v2604 = vpop.f32.mrf.mxu0
          %v2605 = vadd.f32 0.0, %v2604
          %2606 = vdwg.mxu0
          %2607 = vmatpush.bf16.msra.mxu0 %v2295
          %2608 = vmatpush.bf16.msra.mxu0 %v2287
          %2609 = vmatpush.bf16.msra.mxu0 %v2279
          %2610 = vmatpush.bf16.msra.mxu0 %v2271
          %2611 = vmatpush.bf16.msra.mxu0 %v2263
          %2612 = vmatpush.bf16.msra.mxu0 %v2255
          %2613 = vmatpush.bf16.msra.mxu0 %v2247
          %2614 = vmatpush.bf16.msra.mxu0 %v2239
          %2615 = vmatmul.bf16.gmra.mxu0 %v1782
          %v2616 = vpop.f32.mrf.mxu0
          %v2617 = vadd.f32 %v2603, %v2616
          %v2618 = vpop.f32.mrf.mxu0
          %v2619 = vadd.f32 %v2605, %v2618
          %2620 = vdwg.mxu0
          %2621 = vmatpush.bf16.msra.mxu0 %v2232
          %2622 = vmatpush.bf16.msra.mxu0 %v2224
          %2623 = vmatpush.bf16.msra.mxu0 %v2216
          %2624 = vmatpush.bf16.msra.mxu0 %v2208
          %2625 = vmatpush.bf16.msra.mxu0 %v2200
          %2626 = vmatpush.bf16.msra.mxu0 %v2192
          %2627 = vmatpush.bf16.msra.mxu0 %v2184
          %2628 = vmatpush.bf16.msra.mxu0 %v2176
          %2629 = vmatmul.bf16.gmra.mxu0 %v1781
          %v2630 = vpop.f32.mrf.mxu0
          %v2631 = vadd.f32 0.0, %v2630
          %v2632 = vpop.f32.mrf.mxu0
          %v2633 = vadd.f32 0.0, %v2632
          %2634 = vdwg.mxu0
          %2635 = vmatpush.bf16.msra.mxu0 %v2296
          %2636 = vmatpush.bf16.msra.mxu0 %v2288
          %2637 = vmatpush.bf16.msra.mxu0 %v2280
          %2638 = vmatpush.bf16.msra.mxu0 %v2272
          %2639 = vmatpush.bf16.msra.mxu0 %v2264
          %2640 = vmatpush.bf16.msra.mxu0 %v2256
          %2641 = vmatpush.bf16.msra.mxu0 %v2248
          %2642 = vmatpush.bf16.msra.mxu0 %v2240
          %2643 = vmatmul.bf16.gmra.mxu0 %v1782
          %v2644 = vpop.f32.mrf.mxu0
          %v2645 = vadd.f32 %v2631, %v2644
          %v2646 = vpop.f32.mrf.mxu0
          %v2647 = vadd.f32 %v2633, %v2646
          %2648 = vdwg.mxu0
          %2649 = vst [vmem:[%s293] sm:$0xff] %v2449
          %2650 = vst [vmem:[%s293 + $0x8] sm:$0xff] %v2477
          %2651 = vst [vmem:[%s293 + $0x10] sm:$0xff] %v2505
          %2652 = vst [vmem:[%s293 + $0x18] sm:$0xff] %v2533
          %2653 = vst [vmem:[%s293 + $0x20] sm:$0xff] %v2561
          %2654 = vst [vmem:[%s293 + $0x28] sm:$0xff] %v2589
          %2655 = vst [vmem:[%s293 + $0x30] sm:$0xff] %v2617
          %2656 = vst [vmem:[%s293 + $0x38] sm:$0xff] %v2645
          %2657 = vst [vmem:[%s293 + $0x40] sm:$0xff] %v2451
          %2658 = vst [vmem:[%s293 + $0x48] sm:$0xff] %v2479
          %2659 = vst [vmem:[%s293 + $0x50] sm:$0xff] %v2507
          %2660 = vst [vmem:[%s293 + $0x58] sm:$0xff] %v2535
          %2661 = vst [vmem:[%s293 + $0x60] sm:$0xff] %v2563
          %2662 = vst [vmem:[%s293 + $0x68] sm:$0xff] %v2591
          %2663 = vst [vmem:[%s293 + $0x70] sm:$0xff] %v2619
          %2664 = vst [vmem:[%s293 + $0x78] sm:$0xff] %v2647
        $region48: #{encoder_and_memory_forward.1} parent=31 // pred_fallthru
          _
        %s2665 = smul.u32 %s24, %s23
        %s2666 = smul.u32 2, %s22
        %s2667 = smul.u32 8, %s2665
        %p2668 = scmp.lt.s32.totalorder %s2666, 1
        %s2669 = scalar_select %p2668, %s2666, 1
        %p2670 = scmp.lt.s32.totalorder %s2667, 7
        %s2671 = scalar_select %p2670, %s2667, 7
        %s2672 = smul.addr %s2669, 8
        %s2673 = sadd.s32 %s2671, %s2672
        %s2674 = smul.addr %s2673, 8
        %s2675 = scalar_lea.vmem %s3, %s2674
        // Predicated region
        $region49: #{encoder_and_memory_forward.1} parent=31 // pred_check
          %p2676 = pneg %p137
        $region50: #{encoder_and_memory_forward.1} parent=31 // pred_check_branch
          %2678 = sbr.rel (%p2676) target = $region52
        $region51: #{encoder_and_memory_forward.1} parent=31 // pred_region
          %s2679 = smul.u32 %s24, %s23
          %s2680 = smul.u32 2, %s22
          %s2681 = smul.u32 8, %s2679
        $region52: #{encoder_and_memory_forward.1} parent=31 // pred_fallthru
          _
        // Predicated region
        $region53: #{encoder_and_memory_forward.1} parent=31 // pred_check
          %p2682 = pneg %p163
        $region54: #{encoder_and_memory_forward.1} parent=31 // pred_check_branch
          %2684 = sbr.rel (%p2682) target = $region56
        $region55: #{encoder_and_memory_forward.1} parent=31 // pred_region
          %s2685 = smul.u32 2, %s22
          %2687 = vsyncadd [#allocation6], 0
          %s2688 = smul.addr %s2685, 2
          %s2689 = smul.addr %s2688, 8
          %s2690 = scalar_lea.hbm %s4, %s2689
          %s2691 = sshll.u32 [#allocation5], 4
          %s2692 = int_to_ptr.vmem [resolvable:$true] %s2691
          %s2693 = sshll.u32 %s2690, 4
          %s2694 = int_to_ptr.hbm [resolvable:$true] %s2693
          %2699 = dma.vmem_to_hbm [thread:$0]  %s2692, 512, %s2694, [#allocation6], 256, 256, 16
        $region56: #{encoder_and_memory_forward.1} parent=31 // pred_fallthru
          _
        // Predicated region
        $region57: #{encoder_and_memory_forward.1} parent=31 // pred_check
          %p2700 = pneg %p163
        $region58: #{encoder_and_memory_forward.1} parent=31 // pred_check_branch
          %2702 = sbr.rel (%p2700) target = $region60
        $region59: #{encoder_and_memory_forward.1} parent=31 // pred_region
          %2704 = dma.done [#allocation6], 512
        $region60: #{encoder_and_memory_forward.1} parent=31 // pred_fallthru
          _
      $region32: #{encoder_and_memory_forward.1} parent=5 // pred_fallthru
        _
      %p2705 = scmp.le.s32.totalorder 2, %s12
      // Predicated region
      $region61: #{encoder_and_memory_forward.1} parent=5 // pred_check
        %p2706 = pneg %p2705
      $region62: #{encoder_and_memory_forward.1} parent=5 // pred_check_branch
        %2708 = sbr.rel (%p2706) target = $region64
      $region63: #{encoder_and_memory_forward.1} parent=5 // pred_region
        %s2709 = ssub.s32 %s12, 2
        // Predicated region
        $region65: #{encoder_and_memory_forward.1} parent=63 // pred_check
          %p2710 = pneg %p143
        $region66: #{encoder_and_memory_forward.1} parent=63 // pred_check_branch
          %2712 = sbr.rel (%p2710) target = $region68
        $region67: #{encoder_and_memory_forward.1} parent=63 // pred_region
          %s2713 = smul.u32 %s27, %s26
          %s2714 = smul.u32 2, %s25
          %s2715 = smul.u32 8, %s2713
          %p2716 = scmp.lt.s32.totalorder %s2714, 1
          %s2717 = scalar_select %p2716, %s2714, 1
          %p2718 = scmp.lt.s32.totalorder %s2715, 7
          %s2719 = scalar_select %p2718, %s2715, 7
          %s2720 = smul.addr %s2717, 8
          %s2721 = sadd.s32 %s2719, %s2720
          %s2722 = smul.addr %s2721, 8
          %s2723 = scalar_lea.vmem %s3, %s2722
        $region68: #{encoder_and_memory_forward.1} parent=63 // pred_fallthru
          _
      $region64: #{encoder_and_memory_forward.1} parent=5 // pred_fallthru
        _
    $region6: #{encoder_and_memory_forward.1} parent=1 // loop_footer
      %s16 = sadd.s32 1, %s12
    $region7: #{encoder_and_memory_forward.1} parent=1 // loop_footer_branch
      %11 = sbr.rel target = $region3
    $region8: #{encoder_and_memory_forward.1} parent=1 // loop_exit
      _
    %2724 = vsyncpa [#allocation6], 1
    %s2725 = scalar_lea.sflag [#allocation6], 1
    %2726 = vsyncpa %s2725, 1

</llo_original>
